<compile_context>
chip_gen: v6e
topology: v6e:2x2x1
jax: 0.10.0
libtpu: 0.0.40
codegen_flags: <defaults>
</compile_context>

<pallas_src>
import functools

import numpy as np
import jax
import jax.numpy as jnp
from jax.experimental import pallas as pl
from jax.experimental.pallas import tpu as pltpu

NUM_BANDS = 5


# ----------------------------- Pallas kernel --------------------------------

def _make_fused_kernel(K: int, num_hidden: int, bt: int, lpad: int, num_classes: int):
    H, C = num_hidden, num_classes

    def kernel(w_ref, x_ref, wl_ref, bl_ref, m_ref, fcb_ref, out_ref):
        # w_ref  : (LPAD, LPAD) bf16  block-diagonal (per-band) symmetric adjacency
        # x_ref  : (BT, LPAD)   bf16  node features, lane = band*N + node (zero-padded)
        # wl_ref : (H, LPAD)    f32   lin weight, row h = lin_w[h] broadcast
        # bl_ref : (H, LPAD)    f32   lin bias,   row h = lin_b[h] broadcast
        # m_ref  : (H, LPAD, C) bf16  fused pool+fc matrix, zero rows for padded lanes
        # fcb_ref: (1, C)       f32   final fc bias
        # out_ref: (BT, C)      f32   logits

        # --- NewSGConv.norm, one pass over the whole block-diagonal matrix ---
        W = w_ref[...].astype(jnp.float32)                      # (L, L)
        aW = jnp.abs(W)
        deg_r = jnp.sum(aW, axis=1, keepdims=True)               # (L, 1)
        deg_c = jnp.sum(aW, axis=0, keepdims=True)               # (1, L) == deg_r.T (symmetric)
        inv_r = jnp.where(deg_r > 0.0, jax.lax.rsqrt(deg_r), 0.0)
        inv_c = jnp.where(deg_c > 0.0, jax.lax.rsqrt(deg_c), 0.0)
        S = (inv_r * W * inv_c).astype(jnp.bfloat16)             # (L, L)

        # --- K-hop propagation: all bands + batch tile in one MXU matmul per hop.
        #     S is symmetric so right-multiplication equals S @ x per graph/band.
        X = x_ref[...]                                           # (BT, L) bf16
        for _ in range(K):
            X = jnp.dot(X, S, preferred_element_type=jnp.float32).astype(jnp.bfloat16)
        Xf = X.astype(jnp.float32)

        # --- shared SGConv linear (in_features=1) + relu, fused with
        #     global_add_pool and the final fc: acc += relu(w_h*X + b_h) @ M[h]
        wl = wl_ref[...]                                         # (H, L) f32
        bl = bl_ref[...]
        acc = jnp.zeros((bt, C), jnp.float32)
        for h in range(H):
            Zh = jnp.maximum(Xf * wl[h:h + 1, :] + bl[h:h + 1, :], 0.0)   # (BT, L)
            acc = acc + jnp.dot(Zh.astype(jnp.bfloat16), m_ref[h],
                                preferred_element_type=jnp.float32)       # (BT, C)

        # dropout is identity in eval mode; output is a small masked store (C=3).
        out_ref[...] = acc + fcb_ref[...]

    return kernel


# ------------------------------- wrapper -------------------------------------

@functools.lru_cache(maxsize=None)
def _tril_gather_idx(n: int) -> np.ndarray:
    """(N, N) gather index into the row-major lower-tri parameter vector."""
    ar = np.arange(n)
    rr = np.maximum(ar[:, None], ar[None, :])
    cc = np.minimum(ar[:, None], ar[None, :])
    return np.asarray(rr * (rr + 1) // 2 + cc, dtype=np.int32)


@functools.partial(jax.jit, static_argnames=("num_nodes", "batch_size", "K"))
def symsim_gcn_forward(x, edge_weight_tril, lin_w, lin_b, fc_w, fc_b,
                       *, num_nodes, batch_size, K):
    """Forward pass of SymSimGCNNet (domain_adaptation='', eval mode).

    x               : (B*N, 5)       node features, node index = b*N + n
    edge_weight_tril: (N(N+1)/2, 5)  learnable lower-triangular edge weights
    lin_w           : (H, 1), lin_b: (H,)   (conv1.lin)
    fc_w            : (C, 5H), fc_b: (C,)   (final fc)
    returns (logits (B, C), domain_output=None)
    """
    N, B, NB = num_nodes, batch_size, NUM_BANDS
    H = lin_w.shape[0]
    C = fc_w.shape[0]
    L = NB * N
    LPAD = ((L + 127) // 128) * 128            # lane-pad 5N -> multiple of 128
    BT = B if B <= 128 else 128                # batch tile (grid axis, "parallel")
    assert B % BT == 0

    f32, bf16 = jnp.float32, jnp.bfloat16

    # --- block-diagonal symmetric adjacency (gather from tril params), lane-padded ---
    tril_idx = jnp.asarray(_tril_gather_idx(N))                              # (N, N)
    W_band = jnp.transpose(edge_weight_tril[tril_idx, :], (2, 0, 1)).astype(f32)  # (5,N,N)
    W_blk = jnp.zeros((LPAD, LPAD), f32)
    for i in range(NB):
        W_blk = W_blk.at[i * N:(i + 1) * N, i * N:(i + 1) * N].set(W_band[i])
    W_blk = W_blk.astype(bf16)

    # --- node features -> (B, LPAD), lane = band*N + node, zero-padded ---
    Xr = jnp.transpose(x.reshape(B, N, NB), (0, 2, 1)).reshape(B, L)
    X = jnp.zeros((B, LPAD), bf16).at[:, :L].set(Xr.astype(bf16))

    # --- lin weight/bias broadcast to lane rows (f32, VPU side) ---
    wl = jnp.broadcast_to(lin_w.reshape(H, 1).astype(f32), (H, LPAD))
    bl = jnp.broadcast_to(lin_b.reshape(H, 1).astype(f32), (H, LPAD))

    # --- fused pooling + final fc matrix: M[h, i*N+n, c] = fc_w[c, i*H+h],
    #     padded-lane rows stay exactly zero (no bias leak from padded nodes) ---
    fcw_r = jnp.transpose(fc_w.astype(f32)).reshape(NB, H, C)        # [i, h, c]
    M_core = jnp.transpose(fcw_r, (1, 0, 2))                         # (H, NB, C)
    M_core = jnp.broadcast_to(M_core[:, :, None, :], (H, NB, N, C)).reshape(H, L, C)
    M = jnp.zeros((H, LPAD, C), bf16).at[:, :L, :].set(M_core.astype(bf16))

    fcb = fc_b.reshape(1, C).astype(f32)

    kernel = _make_fused_kernel(K, H, BT, LPAD, C)
    flops = 2 * B * LPAD * (K * LPAD + H * C) + 4 * LPAD * LPAD
    bytes_accessed = (LPAD * LPAD * 2 + B * LPAD * 2 + 2 * H * LPAD * 4
                      + H * LPAD * C * 2 + C * 4 + B * C * 4)

    logits = pl.pallas_call(
        kernel,
        out_shape=jax.ShapeDtypeStruct((B, C), f32),
        grid=(B // BT,),
        in_specs=[
            pl.BlockSpec((LPAD, LPAD), lambda i: (0, 0)),
            pl.BlockSpec((BT, LPAD), lambda i: (i, 0)),
            pl.BlockSpec((H, LPAD), lambda i: (0, 0)),
            pl.BlockSpec((H, LPAD), lambda i: (0, 0)),
            pl.BlockSpec((H, LPAD, C), lambda i: (0, 0, 0)),
            pl.BlockSpec((1, C), lambda i: (0, 0)),
        ],
        out_specs=pl.BlockSpec((BT, C), lambda i: (i, 0)),
        compiler_params=pltpu.CompilerParams(dimension_semantics=("parallel",)),
        cost_estimate=pl.CostEstimate(flops=flops, transcendentals=2 * LPAD,
                                      bytes_accessed=bytes_accessed),
    )(W_blk, X, wl, bl, M, fcb)

    # TODO(synk): dropout (training mode) and RevGrad domain classifier not
    # implemented -- eval semantics with domain_adaptation == '' only.
    domain_output = None
    return logits, domain_output


# --------------------------- pure-JAX reference -------------------------------

def _reference_forward(x, edge_weight_tril, lin_w, lin_b, fc_w, fc_b,
                       *, num_nodes, batch_size, K):
    N, B = num_nodes, batch_size
    xs, ys = np.tril_indices(N)                         # row-major, same as torch
    outs = []
    for i in range(NUM_BANDS):
        Wl = jnp.zeros((N, N), jnp.float32).at[xs, ys].set(edge_weight_tril[:, i])
        W = Wl + Wl.T - jnp.diag(jnp.diag(Wl))
        deg = jnp.sum(jnp.abs(W), axis=1)
        dinv = jnp.where(deg > 0, deg ** -0.5, 0.0)
        S = dinv[:, None] * W * dinv[None, :]
        Xi = x[:, i].reshape(B, N).T                    # (N, B)
        for _ in range(K):
            Xi = S @ Xi
        Hmat = jax.nn.relu(Xi[:, :, None] * lin_w[None, None, :, 0]
                           + lin_b[None, None, :])      # (N, B, H)
        outs.append(jnp.sum(Hmat, axis=0))              # (B, H)
    pooled = jnp.concatenate(outs, axis=1)              # (B, 5H)
    return pooled @ fc_w.T + fc_b[None, :]


# --------------------------------- main --------------------------------------

if __name__ == "__main__":
    N, B, H, C, K = 16, 8, 8, 3, 2
    num_tril = N * (N + 1) // 2

    key = jax.random.PRNGKey(0)
    k0, k1, k2, k3, k4, k5 = jax.random.split(key, 6)

    x = jax.random.normal(k0, (B * N, NUM_BANDS), jnp.float32)          # data.x
    edge_weight_tril = 0.1 * jax.random.normal(k1, (num_tril, NUM_BANDS), jnp.float32)
    lin_w = 0.5 * jax.random.normal(k2, (H, 1), jnp.float32)            # conv1.lin.weight
    lin_b = 0.1 * jax.random.normal(k3, (H,), jnp.float32)              # conv1.lin.bias
    fc_w = 0.1 * jax.random.normal(k4, (C, NUM_BANDS * H), jnp.float32)  # fc.weight
    fc_b = 0.1 * jax.random.normal(k5, (C,), jnp.float32)               # fc.bias

    logits, domain_out = symsim_gcn_forward(
        x, edge_weight_tril, lin_w, lin_b, fc_w, fc_b,
        num_nodes=N, batch_size=B, K=K)
    jax.block_until_ready(logits)

    assert logits.shape == (B, C)
    assert domain_out is None

    ref = _reference_forward(x, edge_weight_tril, lin_w, lin_b, fc_w, fc_b,
                             num_nodes=N, batch_size=B, K=K)
    np.testing.assert_allclose(np.asarray(logits), np.asarray(ref),
                               rtol=5e-2, atol=5e-2)     # bf16 MXU operands

    print("KERNEL_OK")
</pallas_src>

<mosaic_0001>
module attributes {stable_mosaic.version = 11 : i64} {
  func.func @kernel(%arg0: i32, %arg1: memref<128x128xbf16, #tpu.memory_space<vmem>>, %arg2: memref<8x128xbf16, #tpu.memory_space<vmem>>, %arg3: memref<8x128xf32, #tpu.memory_space<vmem>>, %arg4: memref<8x128xf32, #tpu.memory_space<vmem>>, %arg5: memref<8x128x3xbf16, #tpu.memory_space<vmem>>, %arg6: memref<1x3xf32, #tpu.memory_space<vmem>>, %arg7: memref<8x3xf32, #tpu.memory_space<vmem>>) attributes {dimension_semantics = [#tpu.dimension_semantics<parallel>], iteration_bounds = array<i64: 1>, scalar_prefetch = 0 : i64, scratch_operands = 0 : i64, tpu.core_type = #tpu.core_type<tc>, window_params = [{pipeline_mode = #tpu.pipeline_mode<synchronous>, transform_indices = @transform_0, window_bounds = array<i64: 128, 128>}, {transform_indices = @transform_1, window_bounds = array<i64: 8, 128>}, {pipeline_mode = #tpu.pipeline_mode<synchronous>, transform_indices = @transform_2, window_bounds = array<i64: 8, 128>}, {pipeline_mode = #tpu.pipeline_mode<synchronous>, transform_indices = @transform_3, window_bounds = array<i64: 8, 128>}, {pipeline_mode = #tpu.pipeline_mode<synchronous>, transform_indices = @transform_4, window_bounds = array<i64: 8, 128, 3>}, {pipeline_mode = #tpu.pipeline_mode<synchronous>, transform_indices = @transform_5, window_bounds = array<i64: 1, 3>}, {transform_indices = @transform_6, window_bounds = array<i64: 8, 3>}]} {
    %c0 = arith.constant 0 : index
    %c0_0 = arith.constant 0 : index
    %0 = vector.load %arg1[%c0, %c0_0] : memref<128x128xbf16, #tpu.memory_space<vmem>>, vector<128x128xbf16>
    %1 = arith.extf %0 : vector<128x128xbf16> to vector<128x128xf32>
    %2 = math.absf %1 : vector<128x128xf32>
    %cst = arith.constant dense<0.000000e+00> : vector<128xf32>
    %3 = vector.multi_reduction <add>, %2, %cst [1] : vector<128x128xf32> to vector<128xf32>
    %4 = vector.shape_cast %3 : vector<128xf32> to vector<128x1xf32>
    %cst_1 = arith.constant dense<0.000000e+00> : vector<128xf32>
    %5 = vector.multi_reduction <add>, %2, %cst_1 [0] : vector<128x128xf32> to vector<128xf32>
    %6 = vector.shape_cast %5 : vector<128xf32> to vector<1x128xf32>
    %cst_2 = arith.constant 0.000000e+00 : f32
    %7 = vector.broadcast %cst_2 : f32 to vector<128x1xf32>
    %8 = arith.cmpf ogt, %4, %7 : vector<128x1xf32>
    %9 = math.rsqrt %4 : vector<128x1xf32>
    %cst_3 = arith.constant 0.000000e+00 : f32
    %10 = vector.broadcast %cst_3 : f32 to vector<128x1xf32>
    %11 = arith.select %8, %9, %10 : vector<128x1xi1>, vector<128x1xf32>
    %cst_4 = arith.constant 0.000000e+00 : f32
    %12 = vector.broadcast %cst_4 : f32 to vector<1x128xf32>
    %13 = arith.cmpf ogt, %6, %12 : vector<1x128xf32>
    %14 = math.rsqrt %6 : vector<1x128xf32>
    %cst_5 = arith.constant 0.000000e+00 : f32
    %15 = vector.broadcast %cst_5 : f32 to vector<1x128xf32>
    %16 = arith.select %13, %14, %15 : vector<1x128xi1>, vector<1x128xf32>
    %17 = vector.broadcast %11 : vector<128x1xf32> to vector<128x128xf32>
    %18 = arith.mulf %17, %1 : vector<128x128xf32>
    %19 = vector.broadcast %16 : vector<1x128xf32> to vector<128x128xf32>
    %20 = arith.mulf %18, %19 : vector<128x128xf32>
    %21 = arith.truncf %20 : vector<128x128xf32> to vector<128x128xbf16>
    %c0_6 = arith.constant 0 : index
    %c0_7 = arith.constant 0 : index
    %22 = vector.load %arg2[%c0_6, %c0_7] : memref<8x128xbf16, #tpu.memory_space<vmem>>, vector<8x128xbf16>
    %cst_8 = arith.constant dense<0.000000e+00> : vector<8x128xf32>
    %23 = tpu.matmul %22, %21, %cst_8 {dimension_numbers = #tpu.dot_dimension_numbers<[1], [0], [0], [1], [0, 0, 1, 1], [], []>} : vector<8x128xbf16>, vector<128x128xbf16>, vector<8x128xf32> -> vector<8x128xf32>
    %24 = arith.truncf %23 : vector<8x128xf32> to vector<8x128xbf16>
    %cst_9 = arith.constant dense<0.000000e+00> : vector<8x128xf32>
    %25 = tpu.matmul %24, %21, %cst_9 {dimension_numbers = #tpu.dot_dimension_numbers<[1], [0], [0], [1], [0, 0, 1, 1], [], []>} : vector<8x128xbf16>, vector<128x128xbf16>, vector<8x128xf32> -> vector<8x128xf32>
    %26 = arith.truncf %25 : vector<8x128xf32> to vector<8x128xbf16>
    %27 = arith.extf %26 : vector<8x128xbf16> to vector<8x128xf32>
    %c0_10 = arith.constant 0 : index
    %c0_11 = arith.constant 0 : index
    %28 = vector.load %arg3[%c0_10, %c0_11] : memref<8x128xf32, #tpu.memory_space<vmem>>, vector<8x128xf32>
    %c0_12 = arith.constant 0 : index
    %c0_13 = arith.constant 0 : index
    %29 = vector.load %arg4[%c0_12, %c0_13] : memref<8x128xf32, #tpu.memory_space<vmem>>, vector<8x128xf32>
    %cst_14 = arith.constant 0.000000e+00 : f32
    %30 = vector.broadcast %cst_14 : f32 to vector<8x3xf32>
    %31 = vector.extract_strided_slice %28 {offsets = [0, 0], sizes = [1, 128], strides = [1, 1]} : vector<8x128xf32> to vector<1x128xf32>
    %32 = vector.broadcast %31 : vector<1x128xf32> to vector<8x128xf32>
    %33 = arith.mulf %27, %32 : vector<8x128xf32>
    %34 = vector.extract_strided_slice %29 {offsets = [0, 0], sizes = [1, 128], strides = [1, 1]} : vector<8x128xf32> to vector<1x128xf32>
    %35 = vector.broadcast %34 : vector<1x128xf32> to vector<8x128xf32>
    %36 = arith.addf %33, %35 : vector<8x128xf32>
    %cst_15 = arith.constant 0.000000e+00 : f32
    %37 = vector.broadcast %cst_15 : f32 to vector<8x128xf32>
    %38 = arith.maximumf %36, %37 : vector<8x128xf32>
    %39 = arith.truncf %38 : vector<8x128xf32> to vector<8x128xbf16>
    %c0_16 = arith.constant 0 : index
    %c0_17 = arith.constant 0 : index
    %c0_18 = arith.constant 0 : index
    %40 = vector.load %arg5[%c0_16, %c0_17, %c0_18] : memref<8x128x3xbf16, #tpu.memory_space<vmem>>, vector<1x128x3xbf16>
    %41 = vector.shape_cast %40 : vector<1x128x3xbf16> to vector<128x3xbf16>
    %cst_19 = arith.constant dense<0.000000e+00> : vector<8x3xf32>
    %42 = tpu.matmul %39, %41, %cst_19 {dimension_numbers = #tpu.dot_dimension_numbers<[1], [0], [0], [1], [0, 0, 1, 1], [], []>} : vector<8x128xbf16>, vector<128x3xbf16>, vector<8x3xf32> -> vector<8x3xf32>
    %43 = arith.addf %30, %42 : vector<8x3xf32>
    %44 = vector.extract_strided_slice %28 {offsets = [1, 0], sizes = [1, 128], strides = [1, 1]} : vector<8x128xf32> to vector<1x128xf32>
    %45 = vector.broadcast %44 : vector<1x128xf32> to vector<8x128xf32>
    %46 = arith.mulf %27, %45 : vector<8x128xf32>
    %47 = vector.extract_strided_slice %29 {offsets = [1, 0], sizes = [1, 128], strides = [1, 1]} : vector<8x128xf32> to vector<1x128xf32>
    %48 = vector.broadcast %47 : vector<1x128xf32> to vector<8x128xf32>
    %49 = arith.addf %46, %48 : vector<8x128xf32>
    %cst_20 = arith.constant 0.000000e+00 : f32
    %50 = vector.broadcast %cst_20 : f32 to vector<8x128xf32>
    %51 = arith.maximumf %49, %50 : vector<8x128xf32>
    %52 = arith.truncf %51 : vector<8x128xf32> to vector<8x128xbf16>
    %c1 = arith.constant 1 : index
    %c0_21 = arith.constant 0 : index
    %c0_22 = arith.constant 0 : index
    %53 = vector.load %arg5[%c1, %c0_21, %c0_22] : memref<8x128x3xbf16, #tpu.memory_space<vmem>>, vector<1x128x3xbf16>
    %54 = vector.shape_cast %53 : vector<1x128x3xbf16> to vector<128x3xbf16>
    %cst_23 = arith.constant dense<0.000000e+00> : vector<8x3xf32>
    %55 = tpu.matmul %52, %54, %cst_23 {dimension_numbers = #tpu.dot_dimension_numbers<[1], [0], [0], [1], [0, 0, 1, 1], [], []>} : vector<8x128xbf16>, vector<128x3xbf16>, vector<8x3xf32> -> vector<8x3xf32>
    %56 = arith.addf %43, %55 : vector<8x3xf32>
    %57 = vector.extract_strided_slice %28 {offsets = [2, 0], sizes = [1, 128], strides = [1, 1]} : vector<8x128xf32> to vector<1x128xf32>
    %58 = vector.broadcast %57 : vector<1x128xf32> to vector<8x128xf32>
    %59 = arith.mulf %27, %58 : vector<8x128xf32>
    %60 = vector.extract_strided_slice %29 {offsets = [2, 0], sizes = [1, 128], strides = [1, 1]} : vector<8x128xf32> to vector<1x128xf32>
    %61 = vector.broadcast %60 : vector<1x128xf32> to vector<8x128xf32>
    %62 = arith.addf %59, %61 : vector<8x128xf32>
    %cst_24 = arith.constant 0.000000e+00 : f32
    %63 = vector.broadcast %cst_24 : f32 to vector<8x128xf32>
    %64 = arith.maximumf %62, %63 : vector<8x128xf32>
    %65 = arith.truncf %64 : vector<8x128xf32> to vector<8x128xbf16>
    %c2 = arith.constant 2 : index
    %c0_25 = arith.constant 0 : index
    %c0_26 = arith.constant 0 : index
    %66 = vector.load %arg5[%c2, %c0_25, %c0_26] : memref<8x128x3xbf16, #tpu.memory_space<vmem>>, vector<1x128x3xbf16>
    %67 = vector.shape_cast %66 : vector<1x128x3xbf16> to vector<128x3xbf16>
    %cst_27 = arith.constant dense<0.000000e+00> : vector<8x3xf32>
    %68 = tpu.matmul %65, %67, %cst_27 {dimension_numbers = #tpu.dot_dimension_numbers<[1], [0], [0], [1], [0, 0, 1, 1], [], []>} : vector<8x128xbf16>, vector<128x3xbf16>, vector<8x3xf32> -> vector<8x3xf32>
    %69 = arith.addf %56, %68 : vector<8x3xf32>
    %70 = vector.extract_strided_slice %28 {offsets = [3, 0], sizes = [1, 128], strides = [1, 1]} : vector<8x128xf32> to vector<1x128xf32>
    %71 = vector.broadcast %70 : vector<1x128xf32> to vector<8x128xf32>
    %72 = arith.mulf %27, %71 : vector<8x128xf32>
    %73 = vector.extract_strided_slice %29 {offsets = [3, 0], sizes = [1, 128], strides = [1, 1]} : vector<8x128xf32> to vector<1x128xf32>
    %74 = vector.broadcast %73 : vector<1x128xf32> to vector<8x128xf32>
    %75 = arith.addf %72, %74 : vector<8x128xf32>
    %cst_28 = arith.constant 0.000000e+00 : f32
    %76 = vector.broadcast %cst_28 : f32 to vector<8x128xf32>
    %77 = arith.maximumf %75, %76 : vector<8x128xf32>
    %78 = arith.truncf %77 : vector<8x128xf32> to vector<8x128xbf16>
    %c3 = arith.constant 3 : index
    %c0_29 = arith.constant 0 : index
    %c0_30 = arith.constant 0 : index
    %79 = vector.load %arg5[%c3, %c0_29, %c0_30] : memref<8x128x3xbf16, #tpu.memory_space<vmem>>, vector<1x128x3xbf16>
    %80 = vector.shape_cast %79 : vector<1x128x3xbf16> to vector<128x3xbf16>
    %cst_31 = arith.constant dense<0.000000e+00> : vector<8x3xf32>
    %81 = tpu.matmul %78, %80, %cst_31 {dimension_numbers = #tpu.dot_dimension_numbers<[1], [0], [0], [1], [0, 0, 1, 1], [], []>} : vector<8x128xbf16>, vector<128x3xbf16>, vector<8x3xf32> -> vector<8x3xf32>
    %82 = arith.addf %69, %81 : vector<8x3xf32>
    %83 = vector.extract_strided_slice %28 {offsets = [4, 0], sizes = [1, 128], strides = [1, 1]} : vector<8x128xf32> to vector<1x128xf32>
    %84 = vector.broadcast %83 : vector<1x128xf32> to vector<8x128xf32>
    %85 = arith.mulf %27, %84 : vector<8x128xf32>
    %86 = vector.extract_strided_slice %29 {offsets = [4, 0], sizes = [1, 128], strides = [1, 1]} : vector<8x128xf32> to vector<1x128xf32>
    %87 = vector.broadcast %86 : vector<1x128xf32> to vector<8x128xf32>
    %88 = arith.addf %85, %87 : vector<8x128xf32>
    %cst_32 = arith.constant 0.000000e+00 : f32
    %89 = vector.broadcast %cst_32 : f32 to vector<8x128xf32>
    %90 = arith.maximumf %88, %89 : vector<8x128xf32>
    %91 = arith.truncf %90 : vector<8x128xf32> to vector<8x128xbf16>
    %c4 = arith.constant 4 : index
    %c0_33 = arith.constant 0 : index
    %c0_34 = arith.constant 0 : index
    %92 = vector.load %arg5[%c4, %c0_33, %c0_34] : memref<8x128x3xbf16, #tpu.memory_space<vmem>>, vector<1x128x3xbf16>
    %93 = vector.shape_cast %92 : vector<1x128x3xbf16> to vector<128x3xbf16>
    %cst_35 = arith.constant dense<0.000000e+00> : vector<8x3xf32>
    %94 = tpu.matmul %91, %93, %cst_35 {dimension_numbers = #tpu.dot_dimension_numbers<[1], [0], [0], [1], [0, 0, 1, 1], [], []>} : vector<8x128xbf16>, vector<128x3xbf16>, vector<8x3xf32> -> vector<8x3xf32>
    %95 = arith.addf %82, %94 : vector<8x3xf32>
    %96 = vector.extract_strided_slice %28 {offsets = [5, 0], sizes = [1, 128], strides = [1, 1]} : vector<8x128xf32> to vector<1x128xf32>
    %97 = vector.broadcast %96 : vector<1x128xf32> to vector<8x128xf32>
    %98 = arith.mulf %27, %97 : vector<8x128xf32>
    %99 = vector.extract_strided_slice %29 {offsets = [5, 0], sizes = [1, 128], strides = [1, 1]} : vector<8x128xf32> to vector<1x128xf32>
    %100 = vector.broadcast %99 : vector<1x128xf32> to vector<8x128xf32>
    %101 = arith.addf %98, %100 : vector<8x128xf32>
    %cst_36 = arith.constant 0.000000e+00 : f32
    %102 = vector.broadcast %cst_36 : f32 to vector<8x128xf32>
    %103 = arith.maximumf %101, %102 : vector<8x128xf32>
    %104 = arith.truncf %103 : vector<8x128xf32> to vector<8x128xbf16>
    %c5 = arith.constant 5 : index
    %c0_37 = arith.constant 0 : index
    %c0_38 = arith.constant 0 : index
    %105 = vector.load %arg5[%c5, %c0_37, %c0_38] : memref<8x128x3xbf16, #tpu.memory_space<vmem>>, vector<1x128x3xbf16>
    %106 = vector.shape_cast %105 : vector<1x128x3xbf16> to vector<128x3xbf16>
    %cst_39 = arith.constant dense<0.000000e+00> : vector<8x3xf32>
    %107 = tpu.matmul %104, %106, %cst_39 {dimension_numbers = #tpu.dot_dimension_numbers<[1], [0], [0], [1], [0, 0, 1, 1], [], []>} : vector<8x128xbf16>, vector<128x3xbf16>, vector<8x3xf32> -> vector<8x3xf32>
    %108 = arith.addf %95, %107 : vector<8x3xf32>
    %109 = vector.extract_strided_slice %28 {offsets = [6, 0], sizes = [1, 128], strides = [1, 1]} : vector<8x128xf32> to vector<1x128xf32>
    %110 = vector.broadcast %109 : vector<1x128xf32> to vector<8x128xf32>
    %111 = arith.mulf %27, %110 : vector<8x128xf32>
    %112 = vector.extract_strided_slice %29 {offsets = [6, 0], sizes = [1, 128], strides = [1, 1]} : vector<8x128xf32> to vector<1x128xf32>
    %113 = vector.broadcast %112 : vector<1x128xf32> to vector<8x128xf32>
    %114 = arith.addf %111, %113 : vector<8x128xf32>
    %cst_40 = arith.constant 0.000000e+00 : f32
    %115 = vector.broadcast %cst_40 : f32 to vector<8x128xf32>
    %116 = arith.maximumf %114, %115 : vector<8x128xf32>
    %117 = arith.truncf %116 : vector<8x128xf32> to vector<8x128xbf16>
    %c6 = arith.constant 6 : index
    %c0_41 = arith.constant 0 : index
    %c0_42 = arith.constant 0 : index
    %118 = vector.load %arg5[%c6, %c0_41, %c0_42] : memref<8x128x3xbf16, #tpu.memory_space<vmem>>, vector<1x128x3xbf16>
    %119 = vector.shape_cast %118 : vector<1x128x3xbf16> to vector<128x3xbf16>
    %cst_43 = arith.constant dense<0.000000e+00> : vector<8x3xf32>
    %120 = tpu.matmul %117, %119, %cst_43 {dimension_numbers = #tpu.dot_dimension_numbers<[1], [0], [0], [1], [0, 0, 1, 1], [], []>} : vector<8x128xbf16>, vector<128x3xbf16>, vector<8x3xf32> -> vector<8x3xf32>
    %121 = arith.addf %108, %120 : vector<8x3xf32>
    %122 = vector.extract_strided_slice %28 {offsets = [7, 0], sizes = [1, 128], strides = [1, 1]} : vector<8x128xf32> to vector<1x128xf32>
    %123 = vector.broadcast %122 : vector<1x128xf32> to vector<8x128xf32>
    %124 = arith.mulf %27, %123 : vector<8x128xf32>
    %125 = vector.extract_strided_slice %29 {offsets = [7, 0], sizes = [1, 128], strides = [1, 1]} : vector<8x128xf32> to vector<1x128xf32>
    %126 = vector.broadcast %125 : vector<1x128xf32> to vector<8x128xf32>
    %127 = arith.addf %124, %126 : vector<8x128xf32>
    %cst_44 = arith.constant 0.000000e+00 : f32
    %128 = vector.broadcast %cst_44 : f32 to vector<8x128xf32>
    %129 = arith.maximumf %127, %128 : vector<8x128xf32>
    %130 = arith.truncf %129 : vector<8x128xf32> to vector<8x128xbf16>
    %c7 = arith.constant 7 : index
    %c0_45 = arith.constant 0 : index
    %c0_46 = arith.constant 0 : index
    %131 = vector.load %arg5[%c7, %c0_45, %c0_46] : memref<8x128x3xbf16, #tpu.memory_space<vmem>>, vector<1x128x3xbf16>
    %132 = vector.shape_cast %131 : vector<1x128x3xbf16> to vector<128x3xbf16>
    %cst_47 = arith.constant dense<0.000000e+00> : vector<8x3xf32>
    %133 = tpu.matmul %130, %132, %cst_47 {dimension_numbers = #tpu.dot_dimension_numbers<[1], [0], [0], [1], [0, 0, 1, 1], [], []>} : vector<8x128xbf16>, vector<128x3xbf16>, vector<8x3xf32> -> vector<8x3xf32>
    %134 = arith.addf %121, %133 : vector<8x3xf32>
    %c0_48 = arith.constant 0 : index
    %c0_49 = arith.constant 0 : index
    %135 = vector.load %arg6[%c0_48, %c0_49] : memref<1x3xf32, #tpu.memory_space<vmem>>, vector<1x3xf32>
    %136 = vector.broadcast %135 : vector<1x3xf32> to vector<8x3xf32>
    %137 = arith.addf %134, %136 : vector<8x3xf32>
    %c0_50 = arith.constant 0 : index
    %c0_51 = arith.constant 0 : index
    %138 = vector.load %arg7[%c0_50, %c0_51] : memref<8x3xf32, #tpu.memory_space<vmem>>, vector<8x3xf32>
    tpu.vector_store %arg7[%c0_50, %c0_51], %137 {strides = array<i32>} : memref<8x3xf32, #tpu.memory_space<vmem>>, vector<8x3xf32>,
    return
  }
  func.func @transform_0(%arg0: i32) -> (i32, i32) {
    %c0_i32 = arith.constant 0 : i32
    %c0_i32_0 = arith.constant 0 : i32
    %c0_i32_1 = arith.constant 0 : i32
    return %c0_i32, %c0_i32_0 : i32, i32
  }
  func.func @transform_1(%arg0: i32) -> (i32, i32) {
    %c0_i32 = arith.constant 0 : i32
    %c0_i32_0 = arith.constant 0 : i32
    return %arg0, %c0_i32 : i32, i32
  }
  func.func @transform_2(%arg0: i32) -> (i32, i32) {
    %c0_i32 = arith.constant 0 : i32
    %c0_i32_0 = arith.constant 0 : i32
    %c0_i32_1 = arith.constant 0 : i32
    return %c0_i32, %c0_i32_0 : i32, i32
  }
  func.func @transform_3(%arg0: i32) -> (i32, i32) {
    %c0_i32 = arith.constant 0 : i32
    %c0_i32_0 = arith.constant 0 : i32
    %c0_i32_1 = arith.constant 0 : i32
    return %c0_i32, %c0_i32_0 : i32, i32
  }
  func.func @transform_4(%arg0: i32) -> (i32, i32, i32) {
    %c0_i32 = arith.constant 0 : i32
    %c0_i32_0 = arith.constant 0 : i32
    %c0_i32_1 = arith.constant 0 : i32
    %c0_i32_2 = arith.constant 0 : i32
    return %c0_i32, %c0_i32_0, %c0_i32_1 : i32, i32, i32
  }
  func.func @transform_5(%arg0: i32) -> (i32, i32) {
    %c0_i32 = arith.constant 0 : i32
    %c0_i32_0 = arith.constant 0 : i32
    %c0_i32_1 = arith.constant 0 : i32
    return %c0_i32, %c0_i32_0 : i32, i32
  }
  func.func @transform_6(%arg0: i32) -> (i32, i32) {
    %c0_i32 = arith.constant 0 : i32
    %c0_i32_0 = arith.constant 0 : i32
    return %arg0, %c0_i32 : i32, i32
  }
}

</mosaic_0001>

<llo_original>
// kernel: symsim_gcn_forward.1
$region0: #{symsim_gcn_forward.1}
  #allocation0 [shape = 'u32[]', space=smem, size = 0x4, offset = 0x4, fixed_abs, tag = 'smem constant byte address 0x4 - core index']
  #allocation1 [shape = 'u32[144,128]{1,0:T(1,128)}', space=vmem, size = 0x12000, scoped, tag = 'internal scratch']
  %s0 = inlined_call_operand.vmem [shape: bf16[128,128], index: 0, kind: input, shape index: {}]
  %s1 = inlined_call_operand.vmem [shape: bf16[8,128], index: 1, kind: input, shape index: {}]
  %s2 = inlined_call_operand.vmem [shape: f32[8,128], index: 2, kind: input, shape index: {}]
  %s3 = inlined_call_operand.vmem [shape: f32[8,128], index: 3, kind: input, shape index: {}]
  %s4 = inlined_call_operand.vmem [shape: bf16[8,128,3], index: 4, kind: input, shape index: {}]
  %s5 = inlined_call_operand.vmem [shape: f32[1,3], index: 5, kind: input, shape index: {}]
  %s6 = inlined_call_operand.vmem [shape: f32[8,3], index: 6, kind: output, shape index: {}]
  %s7 = sld [smem:[#allocation0]]
  $region34: #{symsim_gcn_forward.1} parent=0
    _
  %s9 = ssub.s32 1, %s7
  %s10 = scalar_select 0, %s9, %s7
  // Predicated region
  $region2: #{symsim_gcn_forward.1} parent=0 // pred_check
    _
  $region3: #{symsim_gcn_forward.1} parent=0 // pred_check_branch
    %12 = sbr.rel (0) target = $region5
  $region4: #{symsim_gcn_forward.1} parent=0 // pred_region
    _
  $region5: #{symsim_gcn_forward.1} parent=0 // pred_fallthru
    _
  // Predicated region
  $region6: #{symsim_gcn_forward.1} parent=0 // pred_check
    _
  $region7: #{symsim_gcn_forward.1} parent=0 // pred_check_branch
    %14 = sbr.rel (0) target = $region9
  $region8: #{symsim_gcn_forward.1} parent=0 // pred_region
    _
  $region9: #{symsim_gcn_forward.1} parent=0 // pred_fallthru
    _
  // Predicated region
  $region10: #{symsim_gcn_forward.1} parent=0 // pred_check
    _
  $region11: #{symsim_gcn_forward.1} parent=0 // pred_check_branch
    %16 = sbr.rel (0) target = $region13
  $region12: #{symsim_gcn_forward.1} parent=0 // pred_region
    _
  $region13: #{symsim_gcn_forward.1} parent=0 // pred_fallthru
    _
  // Predicated region
  $region14: #{symsim_gcn_forward.1} parent=0 // pred_check
    _
  $region15: #{symsim_gcn_forward.1} parent=0 // pred_check_branch
    %18 = sbr.rel (0) target = $region17
  $region16: #{symsim_gcn_forward.1} parent=0 // pred_region
    _
  $region17: #{symsim_gcn_forward.1} parent=0 // pred_fallthru
    _
  // Predicated region
  $region18: #{symsim_gcn_forward.1} parent=0 // pred_check
    _
  $region19: #{symsim_gcn_forward.1} parent=0 // pred_check_branch
    %20 = sbr.rel (0) target = $region21
  $region20: #{symsim_gcn_forward.1} parent=0 // pred_region
    _
  $region21: #{symsim_gcn_forward.1} parent=0 // pred_fallthru
    _
  // Predicated region
  $region22: #{symsim_gcn_forward.1} parent=0 // pred_check
    _
  $region23: #{symsim_gcn_forward.1} parent=0 // pred_check_branch
    %22 = sbr.rel (0) target = $region25
  $region24: #{symsim_gcn_forward.1} parent=0 // pred_region
    _
  $region25: #{symsim_gcn_forward.1} parent=0 // pred_fallthru
    _
  %v24 = vld [vmem:[%s0] sm:$0xf]
  %v25 = vld [vmem:[%s0 + $0x4] sm:$0xf]
  %v26 = vld [vmem:[%s0 + $0x8] sm:$0xf]
  %v27 = vld [vmem:[%s0 + $0xc] sm:$0xf]
  %v28 = vld [vmem:[%s0 + $0x10] sm:$0xf]
  %v29 = vld [vmem:[%s0 + $0x14] sm:$0xf]
  %v30 = vld [vmem:[%s0 + $0x18] sm:$0xf]
  %v31 = vld [vmem:[%s0 + $0x1c] sm:$0xf]
  %v32 = vld [vmem:[%s0 + $0x20] sm:$0xf]
  %v33 = vld [vmem:[%s0 + $0x24] sm:$0xf]
  %v34 = vld [vmem:[%s0 + $0x28] sm:$0xf]
  %v35 = vld [vmem:[%s0 + $0x2c] sm:$0xf]
  %v36 = vld [vmem:[%s0 + $0x30] sm:$0xf]
  %v37 = vld [vmem:[%s0 + $0x34] sm:$0xf]
  %v38 = vld [vmem:[%s0 + $0x38] sm:$0xf]
  %v39 = vld [vmem:[%s0 + $0x3c] sm:$0xf]
  %v40 = vunpack.c.l.bf16 %v24
  %v41 = vunpack.c.l.bf16 %v25
  %v42 = vunpack.c.l.bf16 %v26
  %v43 = vunpack.c.l.bf16 %v27
  %v44 = vunpack.c.l.bf16 %v28
  %v45 = vunpack.c.l.bf16 %v29
  %v46 = vunpack.c.l.bf16 %v30
  %v47 = vunpack.c.l.bf16 %v31
  %v48 = vunpack.c.l.bf16 %v32
  %v49 = vunpack.c.l.bf16 %v33
  %v50 = vunpack.c.l.bf16 %v34
  %v51 = vunpack.c.l.bf16 %v35
  %v52 = vunpack.c.l.bf16 %v36
  %v53 = vunpack.c.l.bf16 %v37
  %v54 = vunpack.c.l.bf16 %v38
  %v55 = vunpack.c.l.bf16 %v39
  %v56 = vand.u32 2147483647, %v40
  %v57 = vand.u32 2147483647, %v41
  %v58 = vand.u32 2147483647, %v42
  %v59 = vand.u32 2147483647, %v43
  %v60 = vand.u32 2147483647, %v44
  %v61 = vand.u32 2147483647, %v45
  %v62 = vand.u32 2147483647, %v46
  %v63 = vand.u32 2147483647, %v47
  %v64 = vand.u32 2147483647, %v48
  %v65 = vand.u32 2147483647, %v49
  %v66 = vand.u32 2147483647, %v50
  %v67 = vand.u32 2147483647, %v51
  %v68 = vand.u32 2147483647, %v52
  %v69 = vand.u32 2147483647, %v53
  %v70 = vand.u32 2147483647, %v54
  %v71 = vand.u32 2147483647, %v55
  %72 = vadd.xlane.f32.xlu0 %v56
  %v73 = vpop.xlane.xlu0 %72
  %74 = vadd.xlane.f32.xlu0 %v57
  %v75 = vpop.xlane.xlu0 %74
  %76 = vadd.xlane.f32.xlu0 %v58
  %v77 = vpop.xlane.xlu0 %76
  %78 = vadd.xlane.f32.xlu0 %v59
  %v79 = vpop.xlane.xlu0 %78
  %80 = vadd.xlane.f32.xlu0 %v60
  %v81 = vpop.xlane.xlu0 %80
  %82 = vadd.xlane.f32.xlu0 %v61
  %v83 = vpop.xlane.xlu0 %82
  %84 = vadd.xlane.f32.xlu0 %v62
  %v85 = vpop.xlane.xlu0 %84
  %86 = vadd.xlane.f32.xlu0 %v63
  %v87 = vpop.xlane.xlu0 %86
  %88 = vadd.xlane.f32.xlu0 %v64
  %v89 = vpop.xlane.xlu0 %88
  %90 = vadd.xlane.f32.xlu0 %v65
  %v91 = vpop.xlane.xlu0 %90
  %92 = vadd.xlane.f32.xlu0 %v66
  %v93 = vpop.xlane.xlu0 %92
  %94 = vadd.xlane.f32.xlu0 %v67
  %v95 = vpop.xlane.xlu0 %94
  %96 = vadd.xlane.f32.xlu0 %v68
  %v97 = vpop.xlane.xlu0 %96
  %98 = vadd.xlane.f32.xlu0 %v69
  %v99 = vpop.xlane.xlu0 %98
  %100 = vadd.xlane.f32.xlu0 %v70
  %v101 = vpop.xlane.xlu0 %100
  %102 = vadd.xlane.f32.xlu0 %v71
  %v103 = vpop.xlane.xlu0 %102
  %v104 = vadd.f32 %v56, %v57
  %v105 = vadd.f32 %v104, %v58
  %v106 = vadd.f32 %v105, %v59
  %v107 = vadd.f32 %v106, %v60
  %v108 = vadd.f32 %v107, %v61
  %v109 = vadd.f32 %v108, %v62
  %v110 = vadd.f32 %v109, %v63
  %v111 = vadd.f32 %v110, %v64
  %v112 = vadd.f32 %v111, %v65
  %v113 = vadd.f32 %v112, %v66
  %v114 = vadd.f32 %v113, %v67
  %v115 = vadd.f32 %v114, %v68
  %v116 = vadd.f32 %v115, %v69
  %v117 = vadd.f32 %v116, %v70
  %v118 = vadd.f32 %v117, %v71
  %v119 = vrot.slane %v118, 4
  %v120 = vadd.f32 %v118, %v119
  %v121 = vrot.slane %v120, 2
  %v122 = vadd.f32 %v120, %v121
  %v123 = vrot.slane %v122, 1
  %v124 = vadd.f32 %v122, %v123
  %vm125 = vcmp.gt.f32.partialorder %v73, 0.0
  %vm126 = vcmp.gt.f32.partialorder %v75, 0.0
  %vm127 = vcmp.gt.f32.partialorder %v77, 0.0
  %vm128 = vcmp.gt.f32.partialorder %v79, 0.0
  %vm129 = vcmp.gt.f32.partialorder %v81, 0.0
  %vm130 = vcmp.gt.f32.partialorder %v83, 0.0
  %vm131 = vcmp.gt.f32.partialorder %v85, 0.0
  %vm132 = vcmp.gt.f32.partialorder %v87, 0.0
  %vm133 = vcmp.gt.f32.partialorder %v89, 0.0
  %vm134 = vcmp.gt.f32.partialorder %v91, 0.0
  %vm135 = vcmp.gt.f32.partialorder %v93, 0.0
  %vm136 = vcmp.gt.f32.partialorder %v95, 0.0
  %vm137 = vcmp.gt.f32.partialorder %v97, 0.0
  %vm138 = vcmp.gt.f32.partialorder %v99, 0.0
  %vm139 = vcmp.gt.f32.partialorder %v101, 0.0
  %vm140 = vcmp.gt.f32.partialorder %v103, 0.0
  %v141 = vrsqrt.pop %v73
  %v142 = vrsqrt.pop %v75
  %v143 = vrsqrt.pop %v77
  %v144 = vrsqrt.pop %v79
  %v145 = vrsqrt.pop %v81
  %v146 = vrsqrt.pop %v83
  %v147 = vrsqrt.pop %v85
  %v148 = vrsqrt.pop %v87
  %v149 = vrsqrt.pop %v89
  %v150 = vrsqrt.pop %v91
  %v151 = vrsqrt.pop %v93
  %v152 = vrsqrt.pop %v95
  %v153 = vrsqrt.pop %v97
  %v154 = vrsqrt.pop %v99
  %v155 = vrsqrt.pop %v101
  %v156 = vrsqrt.pop %v103
  %v157 = vsel %vm125, %v141, 0.0
  %v158 = vsel %vm126, %v142, 0.0
  %v159 = vsel %vm127, %v143, 0.0
  %v160 = vsel %vm128, %v144, 0.0
  %v161 = vsel %vm129, %v145, 0.0
  %v162 = vsel %vm130, %v146, 0.0
  %v163 = vsel %vm131, %v147, 0.0
  %v164 = vsel %vm132, %v148, 0.0
  %v165 = vsel %vm133, %v149, 0.0
  %v166 = vsel %vm134, %v150, 0.0
  %v167 = vsel %vm135, %v151, 0.0
  %v168 = vsel %vm136, %v152, 0.0
  %v169 = vsel %vm137, %v153, 0.0
  %v170 = vsel %vm138, %v154, 0.0
  %v171 = vsel %vm139, %v155, 0.0
  %v172 = vsel %vm140, %v156, 0.0
  %vm173 = vcmp.gt.f32.partialorder %v124, 0.0
  %v174 = vrsqrt.pop %v124
  %v175 = vsel %vm173, %v174, 0.0
  %v176 = vmul.f32 %v157, %v40
  %v177 = vmul.f32 %v158, %v41
  %v178 = vmul.f32 %v159, %v42
  %v179 = vmul.f32 %v160, %v43
  %v180 = vmul.f32 %v161, %v44
  %v181 = vmul.f32 %v162, %v45
  %v182 = vmul.f32 %v163, %v46
  %v183 = vmul.f32 %v164, %v47
  %v184 = vmul.f32 %v165, %v48
  %v185 = vmul.f32 %v166, %v49
  %v186 = vmul.f32 %v167, %v50
  %v187 = vmul.f32 %v168, %v51
  %v188 = vmul.f32 %v169, %v52
  %v189 = vmul.f32 %v170, %v53
  %v190 = vmul.f32 %v171, %v54
  %v191 = vmul.f32 %v172, %v55
  %v192 = vmul.f32 %v176, %v175
  %v193 = vmul.f32 %v177, %v175
  %v194 = vmul.f32 %v178, %v175
  %v195 = vmul.f32 %v179, %v175
  %v196 = vmul.f32 %v180, %v175
  %v197 = vmul.f32 %v181, %v175
  %v198 = vmul.f32 %v182, %v175
  %v199 = vmul.f32 %v183, %v175
  %v200 = vmul.f32 %v184, %v175
  %v201 = vmul.f32 %v185, %v175
  %v202 = vmul.f32 %v186, %v175
  %v203 = vmul.f32 %v187, %v175
  %v204 = vmul.f32 %v188, %v175
  %v205 = vmul.f32 %v189, %v175
  %v206 = vmul.f32 %v190, %v175
  %v207 = vmul.f32 %v191, %v175
  %v208 = vpack.c.bf16 %v193, %v192
  %v209 = vpack.c.bf16 %v195, %v194
  %v210 = vpack.c.bf16 %v197, %v196
  %v211 = vpack.c.bf16 %v199, %v198
  %v212 = vpack.c.bf16 %v201, %v200
  %v213 = vpack.c.bf16 %v203, %v202
  %v214 = vpack.c.bf16 %v205, %v204
  %v215 = vpack.c.bf16 %v207, %v206
  %v216 = vld [vmem:[%s1] sm:$0xf]
  %217 = vmatprep.subr.bf16.mxu0 0
  %218 = vmatpush1.bf16.msra.mxu0 %v215
  %219 = vmatprep.subr.bf16.mxu0 0
  %220 = vmatpush1.bf16.msra.mxu0 %v214
  %221 = vmatprep.subr.bf16.mxu0 0
  %222 = vmatpush1.bf16.msra.mxu0 %v213
  %223 = vmatprep.subr.bf16.mxu0 0
  %224 = vmatpush1.bf16.msra.mxu0 %v212
  %225 = vmatprep.subr.bf16.mxu0 0
  %226 = vmatpush1.bf16.msra.mxu0 %v211
  %227 = vmatprep.subr.bf16.mxu0 0
  %228 = vmatpush1.bf16.msra.mxu0 %v210
  %229 = vmatprep.subr.bf16.mxu0 0
  %230 = vmatpush1.bf16.msra.mxu0 %v209
  %231 = vmatprep.subr.bf16.mxu0 0
  %232 = vmatpush1.bf16.msra.mxu0 %v208
  %233 = vmatprep.subr.bf16.mxu0 0
  %234 = vmatpush2.bf16.msra.mxu0 0
  %235 = vmatprep.subr.bf16.mxu0 0
  %236 = vmatpush2.bf16.msra.mxu0 0
  %237 = vmatprep.subr.bf16.mxu0 0
  %238 = vmatpush2.bf16.msra.mxu0 0
  %239 = vmatprep.subr.bf16.mxu0 0
  %240 = vmatpush2.bf16.msra.mxu0 0
  %241 = vmatprep.subr.bf16.mxu0 0
  %242 = vmatpush2.bf16.msra.mxu0 0
  %243 = vmatprep.subr.bf16.mxu0 0
  %244 = vmatpush2.bf16.msra.mxu0 0
  %245 = vmatprep.subr.bf16.mxu0 0
  %246 = vmatpush2.bf16.msra.mxu0 0
  %247 = vmatprep.subr.bf16.mxu0 0
  %248 = vmatpush2.bf16.msra.mxu0 0
  %249 = vmatprep.mubr.bf16.mxu0 0
  %250 = vmatmul.mubr.bf16.gmra.mxu0 %v216
  %v251 = vpop.f32.mrf.mxu0
  %v252 = vadd.f32 0.0, %v251
  %v253 = vpop.f32.mrf.mxu0
  %v254 = vpop.f32.mrf.mxu0
  %v255 = vpop.f32.mrf.mxu0
  %256 = vdwg.mxu0
  %v257 = vpack.c.bf16 %v252, %v252
  %258 = vmatprep.subr.bf16.mxu0 0
  %259 = vmatpush1.bf16.msra.mxu0 %v215
  %260 = vmatprep.subr.bf16.mxu0 0
  %261 = vmatpush1.bf16.msra.mxu0 %v214
  %262 = vmatprep.subr.bf16.mxu0 0
  %263 = vmatpush1.bf16.msra.mxu0 %v213
  %264 = vmatprep.subr.bf16.mxu0 0
  %265 = vmatpush1.bf16.msra.mxu0 %v212
  %266 = vmatprep.subr.bf16.mxu0 0
  %267 = vmatpush1.bf16.msra.mxu0 %v211
  %268 = vmatprep.subr.bf16.mxu0 0
  %269 = vmatpush1.bf16.msra.mxu0 %v210
  %270 = vmatprep.subr.bf16.mxu0 0
  %271 = vmatpush1.bf16.msra.mxu0 %v209
  %272 = vmatprep.subr.bf16.mxu0 0
  %273 = vmatpush1.bf16.msra.mxu0 %v208
  %274 = vmatprep.subr.bf16.mxu0 0
  %275 = vmatpush2.bf16.msra.mxu0 0
  %276 = vmatprep.subr.bf16.mxu0 0
  %277 = vmatpush2.bf16.msra.mxu0 0
  %278 = vmatprep.subr.bf16.mxu0 0
  %279 = vmatpush2.bf16.msra.mxu0 0
  %280 = vmatprep.subr.bf16.mxu0 0
  %281 = vmatpush2.bf16.msra.mxu0 0
  %282 = vmatprep.subr.bf16.mxu0 0
  %283 = vmatpush2.bf16.msra.mxu0 0
  %284 = vmatprep.subr.bf16.mxu0 0
  %285 = vmatpush2.bf16.msra.mxu0 0
  %286 = vmatprep.subr.bf16.mxu0 0
  %287 = vmatpush2.bf16.msra.mxu0 0
  %288 = vmatprep.subr.bf16.mxu0 0
  %289 = vmatpush2.bf16.msra.mxu0 0
  %290 = vmatprep.mubr.bf16.mxu0 0
  %291 = vmatmul.mubr.bf16.gmra.mxu0 %v257
  %v292 = vpop.f32.mrf.mxu0
  %v293 = vadd.f32 0.0, %v292
  %v294 = vpop.f32.mrf.mxu0
  %v295 = vpop.f32.mrf.mxu0
  %v296 = vpop.f32.mrf.mxu0
  %297 = vdwg.mxu0
  %v298 = vpack.c.bf16 %v293, %v293
  %v299 = vunpack.c.l.bf16 %v298
  %v300 = vld [vmem:[%s2] sm:$0xff]
  %v301 = vld [vmem:[%s3] sm:$0xff]
  %v302 = vlaneseq
  %v303 = vshrl.u32 %v302, 7
  %v304 = vsub.s32 0, %v303
  %v305 = vrot.slane %v300, %v304
  %v306 = vmul.f32 %v299, %v305
  %v307 = vlaneseq
  %v308 = vshrl.u32 %v307, 7
  %v309 = vsub.s32 0, %v308
  %v310 = vrot.slane %v301, %v309
  %v311 = vadd.f32 %v306, %v310
  %v312 = vmax.f32 %v311, 0.0
  %v313 = vpack.c.bf16 %v312, %v312
  %v314 = vld [vmem:[%s4] sm:$0xf]
  %v315 = vld [vmem:[%s4 + $0x4] sm:$0xf]
  %v316 = vld [vmem:[%s4 + $0x8] sm:$0xf]
  %v317 = vld [vmem:[%s4 + $0xc] sm:$0xf]
  %v318 = vld [vmem:[%s4 + $0x10] sm:$0xf]
  %v319 = vld [vmem:[%s4 + $0x14] sm:$0xf]
  %v320 = vld [vmem:[%s4 + $0x18] sm:$0xf]
  %v321 = vld [vmem:[%s4 + $0x1c] sm:$0xf]
  %v322 = vld [vmem:[%s4 + $0x20] sm:$0xf]
  %v323 = vld [vmem:[%s4 + $0x24] sm:$0xf]
  %v324 = vld [vmem:[%s4 + $0x28] sm:$0xf]
  %v325 = vld [vmem:[%s4 + $0x2c] sm:$0xf]
  %v326 = vld [vmem:[%s4 + $0x30] sm:$0xf]
  %v327 = vld [vmem:[%s4 + $0x34] sm:$0xf]
  %v328 = vld [vmem:[%s4 + $0x38] sm:$0xf]
  %v329 = vld [vmem:[%s4 + $0x3c] sm:$0xf]
  %v330 = vlaneseq
  %v331 = vshrl.u32 %v330, 7
  %v332 = vsub.s32 1, %v331
  %v333 = vrot.slane %v300, %v332
  %v334 = vmul.f32 %v299, %v333
  %v335 = vlaneseq
  %v336 = vshrl.u32 %v335, 7
  %v337 = vsub.s32 1, %v336
  %v338 = vrot.slane %v301, %v337
  %v339 = vadd.f32 %v334, %v338
  %v340 = vmax.f32 %v339, 0.0
  %v341 = vpack.c.bf16 %v340, %v340
  %s342 = scalar_lea.vmem %s4, 64
  %v343 = vld [vmem:[%s342] sm:$0xf]
  %v344 = vld [vmem:[%s342 + $0x4] sm:$0xf]
  %v345 = vld [vmem:[%s342 + $0x8] sm:$0xf]
  %v346 = vld [vmem:[%s342 + $0xc] sm:$0xf]
  %v347 = vld [vmem:[%s342 + $0x10] sm:$0xf]
  %v348 = vld [vmem:[%s342 + $0x14] sm:$0xf]
  %v349 = vld [vmem:[%s342 + $0x18] sm:$0xf]
  %v350 = vld [vmem:[%s342 + $0x1c] sm:$0xf]
  %v351 = vld [vmem:[%s342 + $0x20] sm:$0xf]
  %v352 = vld [vmem:[%s342 + $0x24] sm:$0xf]
  %v353 = vld [vmem:[%s342 + $0x28] sm:$0xf]
  %v354 = vld [vmem:[%s342 + $0x2c] sm:$0xf]
  %v355 = vld [vmem:[%s342 + $0x30] sm:$0xf]
  %v356 = vld [vmem:[%s342 + $0x34] sm:$0xf]
  %v357 = vld [vmem:[%s342 + $0x38] sm:$0xf]
  %v358 = vld [vmem:[%s342 + $0x3c] sm:$0xf]
  %v375 = vunpack.c.l.b16 %v343
  %v376 = vunpack.c.l.b16 %v344
  %v377 = vunpack.c.l.b16 %v345
  %v378 = vunpack.c.l.b16 %v346
  %v379 = vunpack.c.l.b16 %v347
  %v380 = vunpack.c.l.b16 %v348
  %v381 = vunpack.c.l.b16 %v349
  %v382 = vunpack.c.l.b16 %v350
  %v383 = vunpack.c.l.b16 %v351
  %v384 = vunpack.c.l.b16 %v352
  %v385 = vunpack.c.l.b16 %v353
  %v386 = vunpack.c.l.b16 %v354
  %v387 = vunpack.c.l.b16 %v355
  %v388 = vunpack.c.l.b16 %v356
  %v389 = vunpack.c.l.b16 %v357
  %v390 = vunpack.c.l.b16 %v358
  %v391 = vpack.c.b16 %v376, %v375
  %v392 = vpack.c.b16 %v378, %v377
  %v393 = vpack.c.b16 %v380, %v379
  %v394 = vpack.c.b16 %v382, %v381
  %v395 = vpack.c.b16 %v384, %v383
  %v396 = vpack.c.b16 %v386, %v385
  %v397 = vpack.c.b16 %v388, %v387
  %v398 = vpack.c.b16 %v390, %v389
  %407 = vmatprep.subr.bf16.mxu0 0
  %408 = vmatpush1.bf16.msra.mxu0 %v398
  %409 = vmatprep.subr.bf16.mxu0 0
  %410 = vmatpush1.bf16.msra.mxu0 %v397
  %411 = vmatprep.subr.bf16.mxu0 0
  %412 = vmatpush1.bf16.msra.mxu0 %v396
  %413 = vmatprep.subr.bf16.mxu0 0
  %414 = vmatpush1.bf16.msra.mxu0 %v395
  %415 = vmatprep.subr.bf16.mxu0 0
  %416 = vmatpush1.bf16.msra.mxu0 %v394
  %417 = vmatprep.subr.bf16.mxu0 0
  %418 = vmatpush1.bf16.msra.mxu0 %v393
  %419 = vmatprep.subr.bf16.mxu0 0
  %420 = vmatpush1.bf16.msra.mxu0 %v392
  %421 = vmatprep.subr.bf16.mxu0 0
  %422 = vmatpush1.bf16.msra.mxu0 %v391
  %423 = vmatprep.subr.bf16.mxu0 0
  %424 = vmatpush2.bf16.msra.mxu0 0
  %425 = vmatprep.subr.bf16.mxu0 0
  %426 = vmatpush2.bf16.msra.mxu0 0
  %427 = vmatprep.subr.bf16.mxu0 0
  %428 = vmatpush2.bf16.msra.mxu0 0
  %429 = vmatprep.subr.bf16.mxu0 0
  %430 = vmatpush2.bf16.msra.mxu0 0
  %431 = vmatprep.subr.bf16.mxu0 0
  %432 = vmatpush2.bf16.msra.mxu0 0
  %433 = vmatprep.subr.bf16.mxu0 0
  %434 = vmatpush2.bf16.msra.mxu0 0
  %435 = vmatprep.subr.bf16.mxu0 0
  %436 = vmatpush2.bf16.msra.mxu0 0
  %437 = vmatprep.subr.bf16.mxu0 0
  %438 = vmatpush2.bf16.msra.mxu0 0
  %439 = vmatprep.mubr.bf16.mxu0 0
  %440 = vmatmul.mubr.bf16.gmra.mxu0 %v341
  %v441 = vpop.f32.mrf.mxu0
  %v442 = vadd.f32 0.0, %v441
  %v443 = vpop.f32.mrf.mxu0
  %v444 = vpop.f32.mrf.mxu0
  %v445 = vpop.f32.mrf.mxu0
  %446 = vdwg.mxu0
  %v463 = vunpack.c.l.b16 %v314
  %v464 = vunpack.c.l.b16 %v315
  %v465 = vunpack.c.l.b16 %v316
  %v466 = vunpack.c.l.b16 %v317
  %v467 = vunpack.c.l.b16 %v318
  %v468 = vunpack.c.l.b16 %v319
  %v469 = vunpack.c.l.b16 %v320
  %v470 = vunpack.c.l.b16 %v321
  %v471 = vunpack.c.l.b16 %v322
  %v472 = vunpack.c.l.b16 %v323
  %v473 = vunpack.c.l.b16 %v324
  %v474 = vunpack.c.l.b16 %v325
  %v475 = vunpack.c.l.b16 %v326
  %v476 = vunpack.c.l.b16 %v327
  %v477 = vunpack.c.l.b16 %v328
  %v478 = vunpack.c.l.b16 %v329
  %v479 = vpack.c.b16 %v464, %v463
  %v480 = vpack.c.b16 %v466, %v465
  %v481 = vpack.c.b16 %v468, %v467
  %v482 = vpack.c.b16 %v470, %v469
  %v483 = vpack.c.b16 %v472, %v471
  %v484 = vpack.c.b16 %v474, %v473
  %v485 = vpack.c.b16 %v476, %v475
  %v486 = vpack.c.b16 %v478, %v477
  %495 = vmatprep.subr.bf16.mxu0 0
  %496 = vmatpush1.bf16.msra.mxu0 %v486
  %497 = vmatprep.subr.bf16.mxu0 0
  %498 = vmatpush1.bf16.msra.mxu0 %v485
  %499 = vmatprep.subr.bf16.mxu0 0
  %500 = vmatpush1.bf16.msra.mxu0 %v484
  %501 = vmatprep.subr.bf16.mxu0 0
  %502 = vmatpush1.bf16.msra.mxu0 %v483
  %503 = vmatprep.subr.bf16.mxu0 0
  %504 = vmatpush1.bf16.msra.mxu0 %v482
  %505 = vmatprep.subr.bf16.mxu0 0
  %506 = vmatpush1.bf16.msra.mxu0 %v481
  %507 = vmatprep.subr.bf16.mxu0 0
  %508 = vmatpush1.bf16.msra.mxu0 %v480
  %509 = vmatprep.subr.bf16.mxu0 0
  %510 = vmatpush1.bf16.msra.mxu0 %v479
  %511 = vmatprep.subr.bf16.mxu0 0
  %512 = vmatpush2.bf16.msra.mxu0 0
  %513 = vmatprep.subr.bf16.mxu0 0
  %514 = vmatpush2.bf16.msra.mxu0 0
  %515 = vmatprep.subr.bf16.mxu0 0
  %516 = vmatpush2.bf16.msra.mxu0 0
  %517 = vmatprep.subr.bf16.mxu0 0
  %518 = vmatpush2.bf16.msra.mxu0 0
  %519 = vmatprep.subr.bf16.mxu0 0
  %520 = vmatpush2.bf16.msra.mxu0 0
  %521 = vmatprep.subr.bf16.mxu0 0
  %522 = vmatpush2.bf16.msra.mxu0 0
  %523 = vmatprep.subr.bf16.mxu0 0
  %524 = vmatpush2.bf16.msra.mxu0 0
  %525 = vmatprep.subr.bf16.mxu0 0
  %526 = vmatpush2.bf16.msra.mxu0 0
  %527 = vmatprep.mubr.bf16.mxu0 0
  %528 = vmatmul.mubr.bf16.gmra.mxu0 %v313
  %v529 = vpop.f32.mrf.mxu0
  %v530 = vadd.f32 %v442, %v529
  %v531 = vpop.f32.mrf.mxu0
  %v532 = vpop.f32.mrf.mxu0
  %v533 = vpop.f32.mrf.mxu0
  %534 = vdwg.mxu0
  %v535 = vlaneseq
  %v536 = vshrl.u32 %v535, 7
  %v537 = vsub.s32 2, %v536
  %v538 = vrot.slane %v300, %v537
  %v539 = vmul.f32 %v299, %v538
  %v540 = vlaneseq
  %v541 = vshrl.u32 %v540, 7
  %v542 = vsub.s32 2, %v541
  %v543 = vrot.slane %v301, %v542
  %v544 = vadd.f32 %v539, %v543
  %v545 = vmax.f32 %v544, 0.0
  %v546 = vpack.c.bf16 %v545, %v545
  %s547 = scalar_lea.vmem %s4, 128
  %v548 = vld [vmem:[%s547] sm:$0xf]
  %v549 = vld [vmem:[%s547 + $0x4] sm:$0xf]
  %v550 = vld [vmem:[%s547 + $0x8] sm:$0xf]
  %v551 = vld [vmem:[%s547 + $0xc] sm:$0xf]
  %v552 = vld [vmem:[%s547 + $0x10] sm:$0xf]
  %v553 = vld [vmem:[%s547 + $0x14] sm:$0xf]
  %v554 = vld [vmem:[%s547 + $0x18] sm:$0xf]
  %v555 = vld [vmem:[%s547 + $0x1c] sm:$0xf]
  %v556 = vld [vmem:[%s547 + $0x20] sm:$0xf]
  %v557 = vld [vmem:[%s547 + $0x24] sm:$0xf]
  %v558 = vld [vmem:[%s547 + $0x28] sm:$0xf]
  %v559 = vld [vmem:[%s547 + $0x2c] sm:$0xf]
  %v560 = vld [vmem:[%s547 + $0x30] sm:$0xf]
  %v561 = vld [vmem:[%s547 + $0x34] sm:$0xf]
  %v562 = vld [vmem:[%s547 + $0x38] sm:$0xf]
  %v563 = vld [vmem:[%s547 + $0x3c] sm:$0xf]
  %v580 = vunpack.c.l.b16 %v548
  %v581 = vunpack.c.l.b16 %v549
  %v582 = vunpack.c.l.b16 %v550
  %v583 = vunpack.c.l.b16 %v551
  %v584 = vunpack.c.l.b16 %v552
  %v585 = vunpack.c.l.b16 %v553
  %v586 = vunpack.c.l.b16 %v554
  %v587 = vunpack.c.l.b16 %v555
  %v588 = vunpack.c.l.b16 %v556
  %v589 = vunpack.c.l.b16 %v557
  %v590 = vunpack.c.l.b16 %v558
  %v591 = vunpack.c.l.b16 %v559
  %v592 = vunpack.c.l.b16 %v560
  %v593 = vunpack.c.l.b16 %v561
  %v594 = vunpack.c.l.b16 %v562
  %v595 = vunpack.c.l.b16 %v563
  %v596 = vpack.c.b16 %v581, %v580
  %v597 = vpack.c.b16 %v583, %v582
  %v598 = vpack.c.b16 %v585, %v584
  %v599 = vpack.c.b16 %v587, %v586
  %v600 = vpack.c.b16 %v589, %v588
  %v601 = vpack.c.b16 %v591, %v590
  %v602 = vpack.c.b16 %v593, %v592
  %v603 = vpack.c.b16 %v595, %v594
  %612 = vmatprep.subr.bf16.mxu0 0
  %613 = vmatpush1.bf16.msra.mxu0 %v603
  %614 = vmatprep.subr.bf16.mxu0 0
  %615 = vmatpush1.bf16.msra.mxu0 %v602
  %616 = vmatprep.subr.bf16.mxu0 0
  %617 = vmatpush1.bf16.msra.mxu0 %v601
  %618 = vmatprep.subr.bf16.mxu0 0
  %619 = vmatpush1.bf16.msra.mxu0 %v600
  %620 = vmatprep.subr.bf16.mxu0 0
  %621 = vmatpush1.bf16.msra.mxu0 %v599
  %622 = vmatprep.subr.bf16.mxu0 0
  %623 = vmatpush1.bf16.msra.mxu0 %v598
  %624 = vmatprep.subr.bf16.mxu0 0
  %625 = vmatpush1.bf16.msra.mxu0 %v597
  %626 = vmatprep.subr.bf16.mxu0 0
  %627 = vmatpush1.bf16.msra.mxu0 %v596
  %628 = vmatprep.subr.bf16.mxu0 0
  %629 = vmatpush2.bf16.msra.mxu0 0
  %630 = vmatprep.subr.bf16.mxu0 0
  %631 = vmatpush2.bf16.msra.mxu0 0
  %632 = vmatprep.subr.bf16.mxu0 0
  %633 = vmatpush2.bf16.msra.mxu0 0
  %634 = vmatprep.subr.bf16.mxu0 0
  %635 = vmatpush2.bf16.msra.mxu0 0
  %636 = vmatprep.subr.bf16.mxu0 0
  %637 = vmatpush2.bf16.msra.mxu0 0
  %638 = vmatprep.subr.bf16.mxu0 0
  %639 = vmatpush2.bf16.msra.mxu0 0
  %640 = vmatprep.subr.bf16.mxu0 0
  %641 = vmatpush2.bf16.msra.mxu0 0
  %642 = vmatprep.subr.bf16.mxu0 0
  %643 = vmatpush2.bf16.msra.mxu0 0
  %644 = vmatprep.mubr.bf16.mxu0 0
  %645 = vmatmul.mubr.bf16.gmra.mxu0 %v546
  %v646 = vpop.f32.mrf.mxu0
  %v647 = vadd.f32 0.0, %v646
  %v648 = vpop.f32.mrf.mxu0
  %v649 = vpop.f32.mrf.mxu0
  %v650 = vpop.f32.mrf.mxu0
  %651 = vdwg.mxu0
  %v652 = vadd.f32 %v530, %v647
  %v653 = vlaneseq
  %v654 = vshrl.u32 %v653, 7
  %v655 = vsub.s32 3, %v654
  %v656 = vrot.slane %v300, %v655
  %v657 = vmul.f32 %v299, %v656
  %v658 = vlaneseq
  %v659 = vshrl.u32 %v658, 7
  %v660 = vsub.s32 3, %v659
  %v661 = vrot.slane %v301, %v660
  %v662 = vadd.f32 %v657, %v661
  %v663 = vmax.f32 %v662, 0.0
  %v664 = vpack.c.bf16 %v663, %v663
  %s665 = scalar_lea.vmem %s4, 192
  %v666 = vld [vmem:[%s665] sm:$0xf]
  %v667 = vld [vmem:[%s665 + $0x4] sm:$0xf]
  %v668 = vld [vmem:[%s665 + $0x8] sm:$0xf]
  %v669 = vld [vmem:[%s665 + $0xc] sm:$0xf]
  %v670 = vld [vmem:[%s665 + $0x10] sm:$0xf]
  %v671 = vld [vmem:[%s665 + $0x14] sm:$0xf]
  %v672 = vld [vmem:[%s665 + $0x18] sm:$0xf]
  %v673 = vld [vmem:[%s665 + $0x1c] sm:$0xf]
  %v674 = vld [vmem:[%s665 + $0x20] sm:$0xf]
  %v675 = vld [vmem:[%s665 + $0x24] sm:$0xf]
  %v676 = vld [vmem:[%s665 + $0x28] sm:$0xf]
  %v677 = vld [vmem:[%s665 + $0x2c] sm:$0xf]
  %v678 = vld [vmem:[%s665 + $0x30] sm:$0xf]
  %v679 = vld [vmem:[%s665 + $0x34] sm:$0xf]
  %v680 = vld [vmem:[%s665 + $0x38] sm:$0xf]
  %v681 = vld [vmem:[%s665 + $0x3c] sm:$0xf]
  %v698 = vunpack.c.l.b16 %v666
  %v699 = vunpack.c.l.b16 %v667
  %v700 = vunpack.c.l.b16 %v668
  %v701 = vunpack.c.l.b16 %v669
  %v702 = vunpack.c.l.b16 %v670
  %v703 = vunpack.c.l.b16 %v671
  %v704 = vunpack.c.l.b16 %v672
  %v705 = vunpack.c.l.b16 %v673
  %v706 = vunpack.c.l.b16 %v674
  %v707 = vunpack.c.l.b16 %v675
  %v708 = vunpack.c.l.b16 %v676
  %v709 = vunpack.c.l.b16 %v677
  %v710 = vunpack.c.l.b16 %v678
  %v711 = vunpack.c.l.b16 %v679
  %v712 = vunpack.c.l.b16 %v680
  %v713 = vunpack.c.l.b16 %v681
  %v714 = vpack.c.b16 %v699, %v698
  %v715 = vpack.c.b16 %v701, %v700
  %v716 = vpack.c.b16 %v703, %v702
  %v717 = vpack.c.b16 %v705, %v704
  %v718 = vpack.c.b16 %v707, %v706
  %v719 = vpack.c.b16 %v709, %v708
  %v720 = vpack.c.b16 %v711, %v710
  %v721 = vpack.c.b16 %v713, %v712
  %730 = vmatprep.subr.bf16.mxu0 0
  %731 = vmatpush1.bf16.msra.mxu0 %v721
  %732 = vmatprep.subr.bf16.mxu0 0
  %733 = vmatpush1.bf16.msra.mxu0 %v720
  %734 = vmatprep.subr.bf16.mxu0 0
  %735 = vmatpush1.bf16.msra.mxu0 %v719
  %736 = vmatprep.subr.bf16.mxu0 0
  %737 = vmatpush1.bf16.msra.mxu0 %v718
  %738 = vmatprep.subr.bf16.mxu0 0
  %739 = vmatpush1.bf16.msra.mxu0 %v717
  %740 = vmatprep.subr.bf16.mxu0 0
  %741 = vmatpush1.bf16.msra.mxu0 %v716
  %742 = vmatprep.subr.bf16.mxu0 0
  %743 = vmatpush1.bf16.msra.mxu0 %v715
  %744 = vmatprep.subr.bf16.mxu0 0
  %745 = vmatpush1.bf16.msra.mxu0 %v714
  %746 = vmatprep.subr.bf16.mxu0 0
  %747 = vmatpush2.bf16.msra.mxu0 0
  %748 = vmatprep.subr.bf16.mxu0 0
  %749 = vmatpush2.bf16.msra.mxu0 0
  %750 = vmatprep.subr.bf16.mxu0 0
  %751 = vmatpush2.bf16.msra.mxu0 0
  %752 = vmatprep.subr.bf16.mxu0 0
  %753 = vmatpush2.bf16.msra.mxu0 0
  %754 = vmatprep.subr.bf16.mxu0 0
  %755 = vmatpush2.bf16.msra.mxu0 0
  %756 = vmatprep.subr.bf16.mxu0 0
  %757 = vmatpush2.bf16.msra.mxu0 0
  %758 = vmatprep.subr.bf16.mxu0 0
  %759 = vmatpush2.bf16.msra.mxu0 0
  %760 = vmatprep.subr.bf16.mxu0 0
  %761 = vmatpush2.bf16.msra.mxu0 0
  %762 = vmatprep.mubr.bf16.mxu0 0
  %763 = vmatmul.mubr.bf16.gmra.mxu0 %v664
  %v764 = vpop.f32.mrf.mxu0
  %v765 = vadd.f32 0.0, %v764
  %v766 = vpop.f32.mrf.mxu0
  %v767 = vpop.f32.mrf.mxu0
  %v768 = vpop.f32.mrf.mxu0
  %769 = vdwg.mxu0
  %v770 = vadd.f32 %v652, %v765
  %v771 = vlaneseq
  %v772 = vshrl.u32 %v771, 7
  %v773 = vsub.s32 4, %v772
  %v774 = vrot.slane %v300, %v773
  %v775 = vmul.f32 %v299, %v774
  %v776 = vlaneseq
  %v777 = vshrl.u32 %v776, 7
  %v778 = vsub.s32 4, %v777
  %v779 = vrot.slane %v301, %v778
  %v780 = vadd.f32 %v775, %v779
  %v781 = vmax.f32 %v780, 0.0
  %v782 = vpack.c.bf16 %v781, %v781
  %s783 = scalar_lea.vmem %s4, 256
  %v784 = vld [vmem:[%s783] sm:$0xf]
  %v785 = vld [vmem:[%s783 + $0x4] sm:$0xf]
  %v786 = vld [vmem:[%s783 + $0x8] sm:$0xf]
  %v787 = vld [vmem:[%s783 + $0xc] sm:$0xf]
  %v788 = vld [vmem:[%s783 + $0x10] sm:$0xf]
  %v789 = vld [vmem:[%s783 + $0x14] sm:$0xf]
  %v790 = vld [vmem:[%s783 + $0x18] sm:$0xf]
  %v791 = vld [vmem:[%s783 + $0x1c] sm:$0xf]
  %v792 = vld [vmem:[%s783 + $0x20] sm:$0xf]
  %v793 = vld [vmem:[%s783 + $0x24] sm:$0xf]
  %v794 = vld [vmem:[%s783 + $0x28] sm:$0xf]
  %v795 = vld [vmem:[%s783 + $0x2c] sm:$0xf]
  %v796 = vld [vmem:[%s783 + $0x30] sm:$0xf]
  %v797 = vld [vmem:[%s783 + $0x34] sm:$0xf]
  %v798 = vld [vmem:[%s783 + $0x38] sm:$0xf]
  %v799 = vld [vmem:[%s783 + $0x3c] sm:$0xf]
  %v816 = vunpack.c.l.b16 %v784
  %v817 = vunpack.c.l.b16 %v785
  %v818 = vunpack.c.l.b16 %v786
  %v819 = vunpack.c.l.b16 %v787
  %v820 = vunpack.c.l.b16 %v788
  %v821 = vunpack.c.l.b16 %v789
  %v822 = vunpack.c.l.b16 %v790
  %v823 = vunpack.c.l.b16 %v791
  %v824 = vunpack.c.l.b16 %v792
  %v825 = vunpack.c.l.b16 %v793
  %v826 = vunpack.c.l.b16 %v794
  %v827 = vunpack.c.l.b16 %v795
  %v828 = vunpack.c.l.b16 %v796
  %v829 = vunpack.c.l.b16 %v797
  %v830 = vunpack.c.l.b16 %v798
  %v831 = vunpack.c.l.b16 %v799
  %v832 = vpack.c.b16 %v817, %v816
  %v833 = vpack.c.b16 %v819, %v818
  %v834 = vpack.c.b16 %v821, %v820
  %v835 = vpack.c.b16 %v823, %v822
  %v836 = vpack.c.b16 %v825, %v824
  %v837 = vpack.c.b16 %v827, %v826
  %v838 = vpack.c.b16 %v829, %v828
  %v839 = vpack.c.b16 %v831, %v830
  %848 = vmatprep.subr.bf16.mxu0 0
  %849 = vmatpush1.bf16.msra.mxu0 %v839
  %850 = vmatprep.subr.bf16.mxu0 0
  %851 = vmatpush1.bf16.msra.mxu0 %v838
  %852 = vmatprep.subr.bf16.mxu0 0
  %853 = vmatpush1.bf16.msra.mxu0 %v837
  %854 = vmatprep.subr.bf16.mxu0 0
  %855 = vmatpush1.bf16.msra.mxu0 %v836
  %856 = vmatprep.subr.bf16.mxu0 0
  %857 = vmatpush1.bf16.msra.mxu0 %v835
  %858 = vmatprep.subr.bf16.mxu0 0
  %859 = vmatpush1.bf16.msra.mxu0 %v834
  %860 = vmatprep.subr.bf16.mxu0 0
  %861 = vmatpush1.bf16.msra.mxu0 %v833
  %862 = vmatprep.subr.bf16.mxu0 0
  %863 = vmatpush1.bf16.msra.mxu0 %v832
  %864 = vmatprep.subr.bf16.mxu0 0
  %865 = vmatpush2.bf16.msra.mxu0 0
  %866 = vmatprep.subr.bf16.mxu0 0
  %867 = vmatpush2.bf16.msra.mxu0 0
  %868 = vmatprep.subr.bf16.mxu0 0
  %869 = vmatpush2.bf16.msra.mxu0 0
  %870 = vmatprep.subr.bf16.mxu0 0
  %871 = vmatpush2.bf16.msra.mxu0 0
  %872 = vmatprep.subr.bf16.mxu0 0
  %873 = vmatpush2.bf16.msra.mxu0 0
  %874 = vmatprep.subr.bf16.mxu0 0
  %875 = vmatpush2.bf16.msra.mxu0 0
  %876 = vmatprep.subr.bf16.mxu0 0
  %877 = vmatpush2.bf16.msra.mxu0 0
  %878 = vmatprep.subr.bf16.mxu0 0
  %879 = vmatpush2.bf16.msra.mxu0 0
  %880 = vmatprep.mubr.bf16.mxu0 0
  %881 = vmatmul.mubr.bf16.gmra.mxu0 %v782
  %v882 = vpop.f32.mrf.mxu0
  %v883 = vadd.f32 0.0, %v882
  %v884 = vpop.f32.mrf.mxu0
  %v885 = vpop.f32.mrf.mxu0
  %v886 = vpop.f32.mrf.mxu0
  %887 = vdwg.mxu0
  %v888 = vadd.f32 %v770, %v883
  %v889 = vlaneseq
  %v890 = vshrl.u32 %v889, 7
  %v891 = vsub.s32 5, %v890
  %v892 = vrot.slane %v300, %v891
  %v893 = vmul.f32 %v299, %v892
  %v894 = vlaneseq
  %v895 = vshrl.u32 %v894, 7
  %v896 = vsub.s32 5, %v895
  %v897 = vrot.slane %v301, %v896
  %v898 = vadd.f32 %v893, %v897
  %v899 = vmax.f32 %v898, 0.0
  %v900 = vpack.c.bf16 %v899, %v899
  %s901 = scalar_lea.vmem %s4, 320
  %v902 = vld [vmem:[%s901] sm:$0xf]
  %v903 = vld [vmem:[%s901 + $0x4] sm:$0xf]
  %v904 = vld [vmem:[%s901 + $0x8] sm:$0xf]
  %v905 = vld [vmem:[%s901 + $0xc] sm:$0xf]
  %v906 = vld [vmem:[%s901 + $0x10] sm:$0xf]
  %v907 = vld [vmem:[%s901 + $0x14] sm:$0xf]
  %v908 = vld [vmem:[%s901 + $0x18] sm:$0xf]
  %v909 = vld [vmem:[%s901 + $0x1c] sm:$0xf]
  %v910 = vld [vmem:[%s901 + $0x20] sm:$0xf]
  %v911 = vld [vmem:[%s901 + $0x24] sm:$0xf]
  %v912 = vld [vmem:[%s901 + $0x28] sm:$0xf]
  %v913 = vld [vmem:[%s901 + $0x2c] sm:$0xf]
  %v914 = vld [vmem:[%s901 + $0x30] sm:$0xf]
  %v915 = vld [vmem:[%s901 + $0x34] sm:$0xf]
  %v916 = vld [vmem:[%s901 + $0x38] sm:$0xf]
  %v917 = vld [vmem:[%s901 + $0x3c] sm:$0xf]
  %v934 = vunpack.c.l.b16 %v902
  %v935 = vunpack.c.l.b16 %v903
  %v936 = vunpack.c.l.b16 %v904
  %v937 = vunpack.c.l.b16 %v905
  %v938 = vunpack.c.l.b16 %v906
  %v939 = vunpack.c.l.b16 %v907
  %v940 = vunpack.c.l.b16 %v908
  %v941 = vunpack.c.l.b16 %v909
  %v942 = vunpack.c.l.b16 %v910
  %v943 = vunpack.c.l.b16 %v911
  %v944 = vunpack.c.l.b16 %v912
  %v945 = vunpack.c.l.b16 %v913
  %v946 = vunpack.c.l.b16 %v914
  %v947 = vunpack.c.l.b16 %v915
  %v948 = vunpack.c.l.b16 %v916
  %v949 = vunpack.c.l.b16 %v917
  %v950 = vpack.c.b16 %v935, %v934
  %v951 = vpack.c.b16 %v937, %v936
  %v952 = vpack.c.b16 %v939, %v938
  %v953 = vpack.c.b16 %v941, %v940
  %v954 = vpack.c.b16 %v943, %v942
  %v955 = vpack.c.b16 %v945, %v944
  %v956 = vpack.c.b16 %v947, %v946
  %v957 = vpack.c.b16 %v949, %v948
  %966 = vmatprep.subr.bf16.mxu0 0
  %967 = vmatpush1.bf16.msra.mxu0 %v957
  %968 = vmatprep.subr.bf16.mxu0 0
  %969 = vmatpush1.bf16.msra.mxu0 %v956
  %970 = vmatprep.subr.bf16.mxu0 0
  %971 = vmatpush1.bf16.msra.mxu0 %v955
  %972 = vmatprep.subr.bf16.mxu0 0
  %973 = vmatpush1.bf16.msra.mxu0 %v954
  %974 = vmatprep.subr.bf16.mxu0 0
  %975 = vmatpush1.bf16.msra.mxu0 %v953
  %976 = vmatprep.subr.bf16.mxu0 0
  %977 = vmatpush1.bf16.msra.mxu0 %v952
  %978 = vmatprep.subr.bf16.mxu0 0
  %979 = vmatpush1.bf16.msra.mxu0 %v951
  %980 = vmatprep.subr.bf16.mxu0 0
  %981 = vmatpush1.bf16.msra.mxu0 %v950
  %982 = vmatprep.subr.bf16.mxu0 0
  %983 = vmatpush2.bf16.msra.mxu0 0
  %984 = vmatprep.subr.bf16.mxu0 0
  %985 = vmatpush2.bf16.msra.mxu0 0
  %986 = vmatprep.subr.bf16.mxu0 0
  %987 = vmatpush2.bf16.msra.mxu0 0
  %988 = vmatprep.subr.bf16.mxu0 0
  %989 = vmatpush2.bf16.msra.mxu0 0
  %990 = vmatprep.subr.bf16.mxu0 0
  %991 = vmatpush2.bf16.msra.mxu0 0
  %992 = vmatprep.subr.bf16.mxu0 0
  %993 = vmatpush2.bf16.msra.mxu0 0
  %994 = vmatprep.subr.bf16.mxu0 0
  %995 = vmatpush2.bf16.msra.mxu0 0
  %996 = vmatprep.subr.bf16.mxu0 0
  %997 = vmatpush2.bf16.msra.mxu0 0
  %998 = vmatprep.mubr.bf16.mxu0 0
  %999 = vmatmul.mubr.bf16.gmra.mxu0 %v900
  %v1000 = vpop.f32.mrf.mxu0
  %v1001 = vadd.f32 0.0, %v1000
  %v1002 = vpop.f32.mrf.mxu0
  %v1003 = vpop.f32.mrf.mxu0
  %v1004 = vpop.f32.mrf.mxu0
  %1005 = vdwg.mxu0
  %v1006 = vadd.f32 %v888, %v1001
  %v1007 = vlaneseq
  %v1008 = vshrl.u32 %v1007, 7
  %v1009 = vsub.s32 6, %v1008
  %v1010 = vrot.slane %v300, %v1009
  %v1011 = vmul.f32 %v299, %v1010
  %v1012 = vlaneseq
  %v1013 = vshrl.u32 %v1012, 7
  %v1014 = vsub.s32 6, %v1013
  %v1015 = vrot.slane %v301, %v1014
  %v1016 = vadd.f32 %v1011, %v1015
  %v1017 = vmax.f32 %v1016, 0.0
  %v1018 = vpack.c.bf16 %v1017, %v1017
  %s1019 = scalar_lea.vmem %s4, 384
  %v1020 = vld [vmem:[%s1019] sm:$0xf]
  %v1021 = vld [vmem:[%s1019 + $0x4] sm:$0xf]
  %v1022 = vld [vmem:[%s1019 + $0x8] sm:$0xf]
  %v1023 = vld [vmem:[%s1019 + $0xc] sm:$0xf]
  %v1024 = vld [vmem:[%s1019 + $0x10] sm:$0xf]
  %v1025 = vld [vmem:[%s1019 + $0x14] sm:$0xf]
  %v1026 = vld [vmem:[%s1019 + $0x18] sm:$0xf]
  %v1027 = vld [vmem:[%s1019 + $0x1c] sm:$0xf]
  %v1028 = vld [vmem:[%s1019 + $0x20] sm:$0xf]
  %v1029 = vld [vmem:[%s1019 + $0x24] sm:$0xf]
  %v1030 = vld [vmem:[%s1019 + $0x28] sm:$0xf]
  %v1031 = vld [vmem:[%s1019 + $0x2c] sm:$0xf]
  %v1032 = vld [vmem:[%s1019 + $0x30] sm:$0xf]
  %v1033 = vld [vmem:[%s1019 + $0x34] sm:$0xf]
  %v1034 = vld [vmem:[%s1019 + $0x38] sm:$0xf]
  %v1035 = vld [vmem:[%s1019 + $0x3c] sm:$0xf]
  %v1052 = vunpack.c.l.b16 %v1020
  %v1053 = vunpack.c.l.b16 %v1021
  %v1054 = vunpack.c.l.b16 %v1022
  %v1055 = vunpack.c.l.b16 %v1023
  %v1056 = vunpack.c.l.b16 %v1024
  %v1057 = vunpack.c.l.b16 %v1025
  %v1058 = vunpack.c.l.b16 %v1026
  %v1059 = vunpack.c.l.b16 %v1027
  %v1060 = vunpack.c.l.b16 %v1028
  %v1061 = vunpack.c.l.b16 %v1029
  %v1062 = vunpack.c.l.b16 %v1030
  %v1063 = vunpack.c.l.b16 %v1031
  %v1064 = vunpack.c.l.b16 %v1032
  %v1065 = vunpack.c.l.b16 %v1033
  %v1066 = vunpack.c.l.b16 %v1034
  %v1067 = vunpack.c.l.b16 %v1035
  %v1068 = vpack.c.b16 %v1053, %v1052
  %v1069 = vpack.c.b16 %v1055, %v1054
  %v1070 = vpack.c.b16 %v1057, %v1056
  %v1071 = vpack.c.b16 %v1059, %v1058
  %v1072 = vpack.c.b16 %v1061, %v1060
  %v1073 = vpack.c.b16 %v1063, %v1062
  %v1074 = vpack.c.b16 %v1065, %v1064
  %v1075 = vpack.c.b16 %v1067, %v1066
  %1084 = vmatprep.subr.bf16.mxu0 0
  %1085 = vmatpush1.bf16.msra.mxu0 %v1075
  %1086 = vmatprep.subr.bf16.mxu0 0
  %1087 = vmatpush1.bf16.msra.mxu0 %v1074
  %1088 = vmatprep.subr.bf16.mxu0 0
  %1089 = vmatpush1.bf16.msra.mxu0 %v1073
  %1090 = vmatprep.subr.bf16.mxu0 0
  %1091 = vmatpush1.bf16.msra.mxu0 %v1072
  %1092 = vmatprep.subr.bf16.mxu0 0
  %1093 = vmatpush1.bf16.msra.mxu0 %v1071
  %1094 = vmatprep.subr.bf16.mxu0 0
  %1095 = vmatpush1.bf16.msra.mxu0 %v1070
  %1096 = vmatprep.subr.bf16.mxu0 0
  %1097 = vmatpush1.bf16.msra.mxu0 %v1069
  %1098 = vmatprep.subr.bf16.mxu0 0
  %1099 = vmatpush1.bf16.msra.mxu0 %v1068
  %1100 = vmatprep.subr.bf16.mxu0 0
  %1101 = vmatpush2.bf16.msra.mxu0 0
  %1102 = vmatprep.subr.bf16.mxu0 0
  %1103 = vmatpush2.bf16.msra.mxu0 0
  %1104 = vmatprep.subr.bf16.mxu0 0
  %1105 = vmatpush2.bf16.msra.mxu0 0
  %1106 = vmatprep.subr.bf16.mxu0 0
  %1107 = vmatpush2.bf16.msra.mxu0 0
  %1108 = vmatprep.subr.bf16.mxu0 0
  %1109 = vmatpush2.bf16.msra.mxu0 0
  %1110 = vmatprep.subr.bf16.mxu0 0
  %1111 = vmatpush2.bf16.msra.mxu0 0
  %1112 = vmatprep.subr.bf16.mxu0 0
  %1113 = vmatpush2.bf16.msra.mxu0 0
  %1114 = vmatprep.subr.bf16.mxu0 0
  %1115 = vmatpush2.bf16.msra.mxu0 0
  %1116 = vmatprep.mubr.bf16.mxu0 0
  %1117 = vmatmul.mubr.bf16.gmra.mxu0 %v1018
  %v1118 = vpop.f32.mrf.mxu0
  %v1119 = vadd.f32 0.0, %v1118
  %v1120 = vpop.f32.mrf.mxu0
  %v1121 = vpop.f32.mrf.mxu0
  %v1122 = vpop.f32.mrf.mxu0
  %1123 = vdwg.mxu0
  %v1124 = vadd.f32 %v1006, %v1119
  %v1125 = vlaneseq
  %v1126 = vshrl.u32 %v1125, 7
  %v1127 = vsub.s32 7, %v1126
  %v1128 = vrot.slane %v300, %v1127
  %v1129 = vmul.f32 %v299, %v1128
  %v1130 = vlaneseq
  %v1131 = vshrl.u32 %v1130, 7
  %v1132 = vsub.s32 7, %v1131
  %v1133 = vrot.slane %v301, %v1132
  %v1134 = vadd.f32 %v1129, %v1133
  %v1135 = vmax.f32 %v1134, 0.0
  %v1136 = vpack.c.bf16 %v1135, %v1135
  %s1137 = scalar_lea.vmem %s4, 448
  %v1138 = vld [vmem:[%s1137] sm:$0xf]
  %v1139 = vld [vmem:[%s1137 + $0x4] sm:$0xf]
  %v1140 = vld [vmem:[%s1137 + $0x8] sm:$0xf]
  %v1141 = vld [vmem:[%s1137 + $0xc] sm:$0xf]
  %v1142 = vld [vmem:[%s1137 + $0x10] sm:$0xf]
  %v1143 = vld [vmem:[%s1137 + $0x14] sm:$0xf]
  %v1144 = vld [vmem:[%s1137 + $0x18] sm:$0xf]
  %v1145 = vld [vmem:[%s1137 + $0x1c] sm:$0xf]
  %v1146 = vld [vmem:[%s1137 + $0x20] sm:$0xf]
  %v1147 = vld [vmem:[%s1137 + $0x24] sm:$0xf]
  %v1148 = vld [vmem:[%s1137 + $0x28] sm:$0xf]
  %v1149 = vld [vmem:[%s1137 + $0x2c] sm:$0xf]
  %v1150 = vld [vmem:[%s1137 + $0x30] sm:$0xf]
  %v1151 = vld [vmem:[%s1137 + $0x34] sm:$0xf]
  %v1152 = vld [vmem:[%s1137 + $0x38] sm:$0xf]
  %v1153 = vld [vmem:[%s1137 + $0x3c] sm:$0xf]
  %v1170 = vunpack.c.l.b16 %v1138
  %v1171 = vunpack.c.l.b16 %v1139
  %v1172 = vunpack.c.l.b16 %v1140
  %v1173 = vunpack.c.l.b16 %v1141
  %v1174 = vunpack.c.l.b16 %v1142
  %v1175 = vunpack.c.l.b16 %v1143
  %v1176 = vunpack.c.l.b16 %v1144
  %v1177 = vunpack.c.l.b16 %v1145
  %v1178 = vunpack.c.l.b16 %v1146
  %v1179 = vunpack.c.l.b16 %v1147
  %v1180 = vunpack.c.l.b16 %v1148
  %v1181 = vunpack.c.l.b16 %v1149
  %v1182 = vunpack.c.l.b16 %v1150
  %v1183 = vunpack.c.l.b16 %v1151
  %v1184 = vunpack.c.l.b16 %v1152
  %v1185 = vunpack.c.l.b16 %v1153
  %v1186 = vpack.c.b16 %v1171, %v1170
  %v1187 = vpack.c.b16 %v1173, %v1172
  %v1188 = vpack.c.b16 %v1175, %v1174
  %v1189 = vpack.c.b16 %v1177, %v1176
  %v1190 = vpack.c.b16 %v1179, %v1178
  %v1191 = vpack.c.b16 %v1181, %v1180
  %v1192 = vpack.c.b16 %v1183, %v1182
  %v1193 = vpack.c.b16 %v1185, %v1184
  %1202 = vmatprep.subr.bf16.mxu0 0
  %1203 = vmatpush1.bf16.msra.mxu0 %v1193
  %1204 = vmatprep.subr.bf16.mxu0 0
  %1205 = vmatpush1.bf16.msra.mxu0 %v1192
  %1206 = vmatprep.subr.bf16.mxu0 0
  %1207 = vmatpush1.bf16.msra.mxu0 %v1191
  %1208 = vmatprep.subr.bf16.mxu0 0
  %1209 = vmatpush1.bf16.msra.mxu0 %v1190
  %1210 = vmatprep.subr.bf16.mxu0 0
  %1211 = vmatpush1.bf16.msra.mxu0 %v1189
  %1212 = vmatprep.subr.bf16.mxu0 0
  %1213 = vmatpush1.bf16.msra.mxu0 %v1188
  %1214 = vmatprep.subr.bf16.mxu0 0
  %1215 = vmatpush1.bf16.msra.mxu0 %v1187
  %1216 = vmatprep.subr.bf16.mxu0 0
  %1217 = vmatpush1.bf16.msra.mxu0 %v1186
  %1218 = vmatprep.subr.bf16.mxu0 0
  %1219 = vmatpush2.bf16.msra.mxu0 0
  %1220 = vmatprep.subr.bf16.mxu0 0
  %1221 = vmatpush2.bf16.msra.mxu0 0
  %1222 = vmatprep.subr.bf16.mxu0 0
  %1223 = vmatpush2.bf16.msra.mxu0 0
  %1224 = vmatprep.subr.bf16.mxu0 0
  %1225 = vmatpush2.bf16.msra.mxu0 0
  %1226 = vmatprep.subr.bf16.mxu0 0
  %1227 = vmatpush2.bf16.msra.mxu0 0
  %1228 = vmatprep.subr.bf16.mxu0 0
  %1229 = vmatpush2.bf16.msra.mxu0 0
  %1230 = vmatprep.subr.bf16.mxu0 0
  %1231 = vmatpush2.bf16.msra.mxu0 0
  %1232 = vmatprep.subr.bf16.mxu0 0
  %1233 = vmatpush2.bf16.msra.mxu0 0
  %1234 = vmatprep.mubr.bf16.mxu0 0
  %1235 = vmatmul.mubr.bf16.gmra.mxu0 %v1136
  %v1236 = vpop.f32.mrf.mxu0
  %v1237 = vadd.f32 0.0, %v1236
  %v1238 = vpop.f32.mrf.mxu0
  %v1239 = vpop.f32.mrf.mxu0
  %v1240 = vpop.f32.mrf.mxu0
  %1241 = vdwg.mxu0
  %v1242 = vadd.f32 %v1124, %v1237
  %v1243 = vld [vmem:[%s5] sm:$0x1]
  %v1245 = vlaneseq
  %v1246 = vshrl.u32 %v1245, 7
  %v1247 = vsub.s32 0, %v1246
  %v1248 = vrot.slane %v1243, %v1247
  %v1250 = vadd.f32 %v1242, %v1248
  %vm1251 = vcmask 23552
  %1252 = vst.msk [vmem:[%s6] sm:$0xff] %vm1251, %v1250
  // Predicated region
  $region26: #{symsim_gcn_forward.1} parent=0 // pred_check
    _
  $region27: #{symsim_gcn_forward.1} parent=0 // pred_check_branch
    %1254 = sbr.rel (0) target = $region29
  $region28: #{symsim_gcn_forward.1} parent=0 // pred_region
    _
  $region29: #{symsim_gcn_forward.1} parent=0 // pred_fallthru
    _
  // Predicated region
  $region30: #{symsim_gcn_forward.1} parent=0 // pred_check
    _
  $region31: #{symsim_gcn_forward.1} parent=0 // pred_check_branch
    %1256 = sbr.rel (0) target = $region33
  $region32: #{symsim_gcn_forward.1} parent=0 // pred_region
    _
  $region33: #{symsim_gcn_forward.1} parent=0 // pred_fallthru
    _

</llo_original>
